<compile_context>
chip_gen: v6e
topology: v6e:2x2x1
jax: 0.10.0
libtpu: 0.0.40
codegen_flags: <defaults>
</compile_context>

<pallas_src>
import jax
import jax.numpy as jnp
from jax import lax
from jax.experimental import pallas as pl
from jax.experimental.pallas import tpu as pltpu


def seqnn_kernel(gates_x_ref, tab_ref,
                 w_hh_ref, w_tab_ref, b_tab_ref,
                 w_out_l_ref, w_out_t_ref, b_out_ref,
                 logits_ref):
    """Forward pass for one batch tile, fully resident in VMEM.

    gates_x_ref: (T, B, 4H)   float32   precomputed seq @ W_ih^T + (b_ih+b_hh),
                                        gate column order (i, f, o, g)
    tab_ref:     (B, F_tab)   float32
    w_hh_ref:    (H, 4H)      float32   (PyTorch W_hh^T, columns reordered i,f,o,g)
    w_tab_ref:   (F_tab, H_t) float32
    b_tab_ref:   (1, H_t)     float32
    w_out_l_ref: (H, 2)       float32   (first H rows of fc_out W^T)
    w_out_t_ref: (H_t, 2)     float32   (last H_t rows of fc_out W^T)
    b_out_ref:   (1, 2)       float32
    logits_ref:  (B, 2)       float32
    """
    T, B, _ = gates_x_ref.shape
    H = w_hh_ref.shape[0]

    w_hh = w_hh_ref[...]

    def step(t, carry):
        h, c = carry
        # Only the recurrent matmul is on the serial critical path now.
        gates = gates_x_ref[t] + jnp.dot(h, w_hh,
                                         preferred_element_type=jnp.float32)
        # Gate order (i, f, o, g): one lane-dense sigmoid + one tanh.
        sig = jax.nn.sigmoid(gates[:, :3 * H])        # (B, 3H) = i | f | o
        g_g = jnp.tanh(gates[:, 3 * H:])              # (B, H)
        i_g = sig[:, 0 * H:1 * H]
        f_g = sig[:, 1 * H:2 * H]
        o_g = sig[:, 2 * H:3 * H]
        c_new = f_g * c + i_g * g_g
        h_new = o_g * jnp.tanh(c_new)
        return (h_new, c_new)

    h0 = jnp.zeros((B, H), jnp.float32)
    c0 = jnp.zeros((B, H), jnp.float32)
    h_last, _ = lax.fori_loop(0, T, step, (h0, c0), unroll=True)

    # Tabular branch: ReLU(Linear(tabular)).
    tab_out = jnp.maximum(
        jnp.dot(tab_ref[...], w_tab_ref[...], preferred_element_type=jnp.float32)
        + b_tab_ref[...], 0.0)                        # (B, H_t)

    # fc_out on concat(lstm_out, tab_out) == h_last @ W_l + tab_out @ W_t + b.
    logits_ref[...] = (
        jnp.dot(h_last, w_out_l_ref[...], preferred_element_type=jnp.float32)
        + jnp.dot(tab_out, w_out_t_ref[...], preferred_element_type=jnp.float32)
        + b_out_ref[...])


@jax.jit
def sequence_nn_forward(tabular_data, sequence_data, params):
    """tabular_data: (B, F_tab); sequence_data: (B, T, F_seq) (batch_first)."""
    B, T, _ = sequence_data.shape
    F_tab = tabular_data.shape[1]
    H_l, H4 = params["w_hh_t"].shape
    H_t = params["w_tab_t"].shape[1]

    # Hoisted input projection: one batched MXU matmul, bias folded, produced
    # directly in (T, B, 4H) layout (no separate transpose of the sequence).
    gates_x = (jnp.einsum("btf,fg->tbg", sequence_data, params["w_ih_t"],
                          preferred_element_type=jnp.float32)
               + params["b_lstm"])                    # (T, B, 4H)

    b_tile = B                                        # whole batch per program
    grid = (pl.cdiv(B, b_tile),)

    out = pl.pallas_call(
        seqnn_kernel,
        out_shape=jax.ShapeDtypeStruct((B, 2), jnp.float32),
        grid=grid,
        in_specs=[
            pl.BlockSpec((T, b_tile, H4), lambda b: (0, b, 0)),   # gates_x
            pl.BlockSpec((b_tile, F_tab), lambda b: (b, 0)),      # tabular
            pl.BlockSpec((H_l, H4), lambda b: (0, 0)),            # w_hh
            pl.BlockSpec((F_tab, H_t), lambda b: (0, 0)),         # w_tab
            pl.BlockSpec((1, H_t), lambda b: (0, 0)),             # b_tab
            pl.BlockSpec((H_l, 2), lambda b: (0, 0)),             # w_out (lstm)
            pl.BlockSpec((H_t, 2), lambda b: (0, 0)),             # w_out (tab)
            pl.BlockSpec((1, 2), lambda b: (0, 0)),               # b_out
        ],
        out_specs=pl.BlockSpec((b_tile, 2), lambda b: (b, 0)),
        compiler_params=pltpu.CompilerParams(
            dimension_semantics=("parallel",)),
    )(gates_x, tabular_data,
      params["w_hh_t"], params["w_tab_t"], params["b_tab"],
      params["w_out_lstm_t"], params["w_out_tab_t"], params["b_out"])
    return out


def init_params(key, num_features_longitudinal, num_features_tabular,
                hidden_dim_longitudinal, hidden_dim_tabular):
    """Deterministic synthetic parameters, shaped like the PyTorch module."""
    F_seq = num_features_longitudinal
    F_tab = num_features_tabular
    H_l = hidden_dim_longitudinal
    H_t = hidden_dim_tabular
    ks = jax.random.split(key, 9)

    def u(k, shape, fan):
        bound = 1.0 / jnp.sqrt(fan)
        return jax.random.uniform(k, shape, jnp.float32, -bound, bound)

    # PyTorch LSTM params: W_ih (4H, F_seq), W_hh (4H, H), b_ih (4H,), b_hh (4H,)
    w_ih = u(ks[0], (4 * H_l, F_seq), H_l)
    w_hh = u(ks[1], (4 * H_l, H_l), H_l)
    b_ih = u(ks[2], (4 * H_l,), H_l)
    b_hh = u(ks[3], (4 * H_l,), H_l)

    # fc_tabular: (H_t, F_tab), bias (H_t,)
    w_tab = u(ks[4], (H_t, F_tab), F_tab)
    b_tab = u(ks[5], (H_t,), F_tab)

    # fc_out: (2, H_l + H_t), bias (2,)
    w_out = u(ks[6], (2, H_l + H_t), H_l + H_t)
    b_out = u(ks[7], (2,), H_l + H_t)

    # Gate-column reorder: PyTorch packs (i, f, g, o); we store (i, f, o, g)
    # so sigmoid can be applied once to a lane-dense 3H slab and tanh to the
    # trailing H columns.  Applied consistently to W_ih, W_hh and the bias,
    # so the math is unchanged.
    def ifog(w_t):  # w_t: (in_dim, 4H) in (i, f, g, o) column order
        i, f, g, o = jnp.split(w_t, 4, axis=-1)
        return jnp.concatenate([i, f, o, g], axis=-1)

    return {
        "w_ih_t": ifog(w_ih.T),                            # (F_seq, 4H)
        "w_hh_t": ifog(w_hh.T),                            # (H,     4H)
        "b_lstm": ifog((b_ih + b_hh).reshape(1, -1)),      # (1, 4H)
        "w_tab_t": w_tab.T,                                # (F_tab, H_t)
        "b_tab": b_tab.reshape(1, -1),                     # (1, H_t)
        "w_out_lstm_t": w_out[:, :H_l].T,                  # (H_l, 2)
        "w_out_tab_t": w_out[:, H_l:].T,                   # (H_t, 2)
        "b_out": b_out.reshape(1, -1),                     # (1, 2)
    }


def reference_forward(tabular_data, sequence_data, params):
    """Pure-JAX reference of the PyTorch forward (gate columns in i,f,o,g order)."""
    B, T, _ = sequence_data.shape
    H = params["w_hh_t"].shape[0]
    h = jnp.zeros((B, H), jnp.float32)
    c = jnp.zeros((B, H), jnp.float32)
    for t in range(T):
        gates = (sequence_data[:, t, :] @ params["w_ih_t"]
                 + h @ params["w_hh_t"] + params["b_lstm"])
        i = jax.nn.sigmoid(gates[:, 0 * H:1 * H])
        f = jax.nn.sigmoid(gates[:, 1 * H:2 * H])
        o = jax.nn.sigmoid(gates[:, 2 * H:3 * H])
        g = jnp.tanh(gates[:, 3 * H:4 * H])
        c = f * c + i * g
        h = o * jnp.tanh(c)
    tab_out = jnp.maximum(tabular_data @ params["w_tab_t"] + params["b_tab"], 0.0)
    return (h @ params["w_out_lstm_t"] + tab_out @ params["w_out_tab_t"]
            + params["b_out"])


if __name__ == "__main__":
    # Small shapes consistent with the module's forward:
    #   batch=2, seq_len=8, num_features_longitudinal=4, num_features_tabular=4,
    #   hidden_dim_longitudinal=32, hidden_dim_tabular=32
    B, T = 2, 8
    F_SEQ, F_TAB = 4, 4
    H_LSTM, H_TAB = 32, 32

    key = jax.random.PRNGKey(0)
    k_tab, k_seq, k_par = jax.random.split(key, 3)
    tabular_data = jax.random.normal(k_tab, (B, F_TAB), jnp.float32)
    sequence_data = jax.random.normal(k_seq, (B, T, F_SEQ), jnp.float32)
    params = init_params(k_par, F_SEQ, F_TAB, H_LSTM, H_TAB)

    logits = sequence_nn_forward(tabular_data, sequence_data, params)
    jax.block_until_ready(logits)

    ref = reference_forward(tabular_data, sequence_data, params)
    assert logits.shape == (B, 2)
    assert jnp.allclose(logits, ref, atol=1e-5, rtol=1e-5)

    print("KERNEL_OK")
</pallas_src>

<mosaic_0001>
module attributes {stable_mosaic.version = 11 : i64} {
  func.func @seqnn_kernel(%arg0: i32, %arg1: memref<8x2x128xf32, #tpu.memory_space<vmem>>, %arg2: memref<2x4xf32, #tpu.memory_space<vmem>>, %arg3: memref<32x128xf32, #tpu.memory_space<vmem>>, %arg4: memref<4x32xf32, #tpu.memory_space<vmem>>, %arg5: memref<1x32xf32, #tpu.memory_space<vmem>>, %arg6: memref<32x2xf32, #tpu.memory_space<vmem>>, %arg7: memref<32x2xf32, #tpu.memory_space<vmem>>, %arg8: memref<1x2xf32, #tpu.memory_space<vmem>>, %arg9: memref<2x2xf32, #tpu.memory_space<vmem>>) attributes {dimension_semantics = [#tpu.dimension_semantics<parallel>], iteration_bounds = array<i64: 1>, scalar_prefetch = 0 : i64, scratch_operands = 0 : i64, tpu.core_type = #tpu.core_type<tc>, window_params = [{transform_indices = @transform_0, window_bounds = array<i64: 8, 2, 128>}, {transform_indices = @transform_1, window_bounds = array<i64: 2, 4>}, {pipeline_mode = #tpu.pipeline_mode<synchronous>, transform_indices = @transform_2, window_bounds = array<i64: 32, 128>}, {pipeline_mode = #tpu.pipeline_mode<synchronous>, transform_indices = @transform_3, window_bounds = array<i64: 4, 32>}, {pipeline_mode = #tpu.pipeline_mode<synchronous>, transform_indices = @transform_4, window_bounds = array<i64: 1, 32>}, {pipeline_mode = #tpu.pipeline_mode<synchronous>, transform_indices = @transform_5, window_bounds = array<i64: 32, 2>}, {pipeline_mode = #tpu.pipeline_mode<synchronous>, transform_indices = @transform_6, window_bounds = array<i64: 32, 2>}, {pipeline_mode = #tpu.pipeline_mode<synchronous>, transform_indices = @transform_7, window_bounds = array<i64: 1, 2>}, {transform_indices = @transform_8, window_bounds = array<i64: 2, 2>}]} {
    %c0 = arith.constant 0 : index
    %c0_0 = arith.constant 0 : index
    %0 = vector.load %arg3[%c0, %c0_0] : memref<32x128xf32, #tpu.memory_space<vmem>>, vector<32x128xf32>
    %cst = arith.constant 0.000000e+00 : f32
    %1 = vector.broadcast %cst : f32 to vector<2x32xf32>
    %cst_1 = arith.constant 0.000000e+00 : f32
    %2 = vector.broadcast %cst_1 : f32 to vector<2x32xf32>
    %c0_i32 = arith.constant 0 : i32
    %3 = arith.index_cast %c0_i32 : i32 to index
    %c0_2 = arith.constant 0 : index
    %c0_3 = arith.constant 0 : index
    %4 = vector.load %arg1[%3, %c0_2, %c0_3] : memref<8x2x128xf32, #tpu.memory_space<vmem>>, vector<1x2x128xf32>
    %5 = vector.shape_cast %4 : vector<1x2x128xf32> to vector<2x128xf32>
    %cst_4 = arith.constant dense<0.000000e+00> : vector<2x128xf32>
    %6 = tpu.matmul %1, %0, %cst_4 {dimension_numbers = #tpu.dot_dimension_numbers<[1], [0], [0], [1], [0, 0, 1, 1], [], []>} : vector<2x32xf32>, vector<32x128xf32>, vector<2x128xf32> -> vector<2x128xf32>
    %7 = arith.addf %5, %6 : vector<2x128xf32>
    %8 = vector.extract_strided_slice %7 {offsets = [0, 0], sizes = [2, 96], strides = [1, 1]} : vector<2x128xf32> to vector<2x96xf32>
    %9 = arith.negf %8 : vector<2x96xf32>
    %10 = math.exp %9 : vector<2x96xf32>
    %cst_5 = arith.constant 1.000000e+00 : f32
    %11 = vector.broadcast %cst_5 : f32 to vector<2x96xf32>
    %12 = arith.addf %11, %10 : vector<2x96xf32>
    %13 = arith.divf %11, %12 : vector<2x96xf32>
    %14 = vector.extract_strided_slice %7 {offsets = [0, 96], sizes = [2, 32], strides = [1, 1]} : vector<2x128xf32> to vector<2x32xf32>
    %15 = math.tanh %14 : vector<2x32xf32>
    %16 = vector.extract_strided_slice %13 {offsets = [0, 0], sizes = [2, 32], strides = [1, 1]} : vector<2x96xf32> to vector<2x32xf32>
    %17 = vector.extract_strided_slice %13 {offsets = [0, 32], sizes = [2, 32], strides = [1, 1]} : vector<2x96xf32> to vector<2x32xf32>
    %18 = vector.extract_strided_slice %13 {offsets = [0, 64], sizes = [2, 32], strides = [1, 1]} : vector<2x96xf32> to vector<2x32xf32>
    %19 = arith.mulf %17, %2 : vector<2x32xf32>
    %20 = arith.mulf %16, %15 : vector<2x32xf32>
    %21 = arith.addf %19, %20 : vector<2x32xf32>
    %22 = math.tanh %21 : vector<2x32xf32>
    %23 = arith.mulf %18, %22 : vector<2x32xf32>
    %c1_i32 = arith.constant 1 : i32
    %24 = arith.index_cast %c1_i32 : i32 to index
    %c0_6 = arith.constant 0 : index
    %c0_7 = arith.constant 0 : index
    %25 = vector.load %arg1[%24, %c0_6, %c0_7] : memref<8x2x128xf32, #tpu.memory_space<vmem>>, vector<1x2x128xf32>
    %26 = vector.shape_cast %25 : vector<1x2x128xf32> to vector<2x128xf32>
    %cst_8 = arith.constant dense<0.000000e+00> : vector<2x128xf32>
    %27 = tpu.matmul %23, %0, %cst_8 {dimension_numbers = #tpu.dot_dimension_numbers<[1], [0], [0], [1], [0, 0, 1, 1], [], []>} : vector<2x32xf32>, vector<32x128xf32>, vector<2x128xf32> -> vector<2x128xf32>
    %28 = arith.addf %26, %27 : vector<2x128xf32>
    %29 = vector.extract_strided_slice %28 {offsets = [0, 0], sizes = [2, 96], strides = [1, 1]} : vector<2x128xf32> to vector<2x96xf32>
    %30 = arith.negf %29 : vector<2x96xf32>
    %31 = math.exp %30 : vector<2x96xf32>
    %cst_9 = arith.constant 1.000000e+00 : f32
    %32 = vector.broadcast %cst_9 : f32 to vector<2x96xf32>
    %33 = arith.addf %32, %31 : vector<2x96xf32>
    %34 = arith.divf %32, %33 : vector<2x96xf32>
    %35 = vector.extract_strided_slice %28 {offsets = [0, 96], sizes = [2, 32], strides = [1, 1]} : vector<2x128xf32> to vector<2x32xf32>
    %36 = math.tanh %35 : vector<2x32xf32>
    %37 = vector.extract_strided_slice %34 {offsets = [0, 0], sizes = [2, 32], strides = [1, 1]} : vector<2x96xf32> to vector<2x32xf32>
    %38 = vector.extract_strided_slice %34 {offsets = [0, 32], sizes = [2, 32], strides = [1, 1]} : vector<2x96xf32> to vector<2x32xf32>
    %39 = vector.extract_strided_slice %34 {offsets = [0, 64], sizes = [2, 32], strides = [1, 1]} : vector<2x96xf32> to vector<2x32xf32>
    %40 = arith.mulf %38, %21 : vector<2x32xf32>
    %41 = arith.mulf %37, %36 : vector<2x32xf32>
    %42 = arith.addf %40, %41 : vector<2x32xf32>
    %43 = math.tanh %42 : vector<2x32xf32>
    %44 = arith.mulf %39, %43 : vector<2x32xf32>
    %c2_i32 = arith.constant 2 : i32
    %45 = arith.index_cast %c2_i32 : i32 to index
    %c0_10 = arith.constant 0 : index
    %c0_11 = arith.constant 0 : index
    %46 = vector.load %arg1[%45, %c0_10, %c0_11] : memref<8x2x128xf32, #tpu.memory_space<vmem>>, vector<1x2x128xf32>
    %47 = vector.shape_cast %46 : vector<1x2x128xf32> to vector<2x128xf32>
    %cst_12 = arith.constant dense<0.000000e+00> : vector<2x128xf32>
    %48 = tpu.matmul %44, %0, %cst_12 {dimension_numbers = #tpu.dot_dimension_numbers<[1], [0], [0], [1], [0, 0, 1, 1], [], []>} : vector<2x32xf32>, vector<32x128xf32>, vector<2x128xf32> -> vector<2x128xf32>
    %49 = arith.addf %47, %48 : vector<2x128xf32>
    %50 = vector.extract_strided_slice %49 {offsets = [0, 0], sizes = [2, 96], strides = [1, 1]} : vector<2x128xf32> to vector<2x96xf32>
    %51 = arith.negf %50 : vector<2x96xf32>
    %52 = math.exp %51 : vector<2x96xf32>
    %cst_13 = arith.constant 1.000000e+00 : f32
    %53 = vector.broadcast %cst_13 : f32 to vector<2x96xf32>
    %54 = arith.addf %53, %52 : vector<2x96xf32>
    %55 = arith.divf %53, %54 : vector<2x96xf32>
    %56 = vector.extract_strided_slice %49 {offsets = [0, 96], sizes = [2, 32], strides = [1, 1]} : vector<2x128xf32> to vector<2x32xf32>
    %57 = math.tanh %56 : vector<2x32xf32>
    %58 = vector.extract_strided_slice %55 {offsets = [0, 0], sizes = [2, 32], strides = [1, 1]} : vector<2x96xf32> to vector<2x32xf32>
    %59 = vector.extract_strided_slice %55 {offsets = [0, 32], sizes = [2, 32], strides = [1, 1]} : vector<2x96xf32> to vector<2x32xf32>
    %60 = vector.extract_strided_slice %55 {offsets = [0, 64], sizes = [2, 32], strides = [1, 1]} : vector<2x96xf32> to vector<2x32xf32>
    %61 = arith.mulf %59, %42 : vector<2x32xf32>
    %62 = arith.mulf %58, %57 : vector<2x32xf32>
    %63 = arith.addf %61, %62 : vector<2x32xf32>
    %64 = math.tanh %63 : vector<2x32xf32>
    %65 = arith.mulf %60, %64 : vector<2x32xf32>
    %c3_i32 = arith.constant 3 : i32
    %66 = arith.index_cast %c3_i32 : i32 to index
    %c0_14 = arith.constant 0 : index
    %c0_15 = arith.constant 0 : index
    %67 = vector.load %arg1[%66, %c0_14, %c0_15] : memref<8x2x128xf32, #tpu.memory_space<vmem>>, vector<1x2x128xf32>
    %68 = vector.shape_cast %67 : vector<1x2x128xf32> to vector<2x128xf32>
    %cst_16 = arith.constant dense<0.000000e+00> : vector<2x128xf32>
    %69 = tpu.matmul %65, %0, %cst_16 {dimension_numbers = #tpu.dot_dimension_numbers<[1], [0], [0], [1], [0, 0, 1, 1], [], []>} : vector<2x32xf32>, vector<32x128xf32>, vector<2x128xf32> -> vector<2x128xf32>
    %70 = arith.addf %68, %69 : vector<2x128xf32>
    %71 = vector.extract_strided_slice %70 {offsets = [0, 0], sizes = [2, 96], strides = [1, 1]} : vector<2x128xf32> to vector<2x96xf32>
    %72 = arith.negf %71 : vector<2x96xf32>
    %73 = math.exp %72 : vector<2x96xf32>
    %cst_17 = arith.constant 1.000000e+00 : f32
    %74 = vector.broadcast %cst_17 : f32 to vector<2x96xf32>
    %75 = arith.addf %74, %73 : vector<2x96xf32>
    %76 = arith.divf %74, %75 : vector<2x96xf32>
    %77 = vector.extract_strided_slice %70 {offsets = [0, 96], sizes = [2, 32], strides = [1, 1]} : vector<2x128xf32> to vector<2x32xf32>
    %78 = math.tanh %77 : vector<2x32xf32>
    %79 = vector.extract_strided_slice %76 {offsets = [0, 0], sizes = [2, 32], strides = [1, 1]} : vector<2x96xf32> to vector<2x32xf32>
    %80 = vector.extract_strided_slice %76 {offsets = [0, 32], sizes = [2, 32], strides = [1, 1]} : vector<2x96xf32> to vector<2x32xf32>
    %81 = vector.extract_strided_slice %76 {offsets = [0, 64], sizes = [2, 32], strides = [1, 1]} : vector<2x96xf32> to vector<2x32xf32>
    %82 = arith.mulf %80, %63 : vector<2x32xf32>
    %83 = arith.mulf %79, %78 : vector<2x32xf32>
    %84 = arith.addf %82, %83 : vector<2x32xf32>
    %85 = math.tanh %84 : vector<2x32xf32>
    %86 = arith.mulf %81, %85 : vector<2x32xf32>
    %c4_i32 = arith.constant 4 : i32
    %87 = arith.index_cast %c4_i32 : i32 to index
    %c0_18 = arith.constant 0 : index
    %c0_19 = arith.constant 0 : index
    %88 = vector.load %arg1[%87, %c0_18, %c0_19] : memref<8x2x128xf32, #tpu.memory_space<vmem>>, vector<1x2x128xf32>
    %89 = vector.shape_cast %88 : vector<1x2x128xf32> to vector<2x128xf32>
    %cst_20 = arith.constant dense<0.000000e+00> : vector<2x128xf32>
    %90 = tpu.matmul %86, %0, %cst_20 {dimension_numbers = #tpu.dot_dimension_numbers<[1], [0], [0], [1], [0, 0, 1, 1], [], []>} : vector<2x32xf32>, vector<32x128xf32>, vector<2x128xf32> -> vector<2x128xf32>
    %91 = arith.addf %89, %90 : vector<2x128xf32>
    %92 = vector.extract_strided_slice %91 {offsets = [0, 0], sizes = [2, 96], strides = [1, 1]} : vector<2x128xf32> to vector<2x96xf32>
    %93 = arith.negf %92 : vector<2x96xf32>
    %94 = math.exp %93 : vector<2x96xf32>
    %cst_21 = arith.constant 1.000000e+00 : f32
    %95 = vector.broadcast %cst_21 : f32 to vector<2x96xf32>
    %96 = arith.addf %95, %94 : vector<2x96xf32>
    %97 = arith.divf %95, %96 : vector<2x96xf32>
    %98 = vector.extract_strided_slice %91 {offsets = [0, 96], sizes = [2, 32], strides = [1, 1]} : vector<2x128xf32> to vector<2x32xf32>
    %99 = math.tanh %98 : vector<2x32xf32>
    %100 = vector.extract_strided_slice %97 {offsets = [0, 0], sizes = [2, 32], strides = [1, 1]} : vector<2x96xf32> to vector<2x32xf32>
    %101 = vector.extract_strided_slice %97 {offsets = [0, 32], sizes = [2, 32], strides = [1, 1]} : vector<2x96xf32> to vector<2x32xf32>
    %102 = vector.extract_strided_slice %97 {offsets = [0, 64], sizes = [2, 32], strides = [1, 1]} : vector<2x96xf32> to vector<2x32xf32>
    %103 = arith.mulf %101, %84 : vector<2x32xf32>
    %104 = arith.mulf %100, %99 : vector<2x32xf32>
    %105 = arith.addf %103, %104 : vector<2x32xf32>
    %106 = math.tanh %105 : vector<2x32xf32>
    %107 = arith.mulf %102, %106 : vector<2x32xf32>
    %c5_i32 = arith.constant 5 : i32
    %108 = arith.index_cast %c5_i32 : i32 to index
    %c0_22 = arith.constant 0 : index
    %c0_23 = arith.constant 0 : index
    %109 = vector.load %arg1[%108, %c0_22, %c0_23] : memref<8x2x128xf32, #tpu.memory_space<vmem>>, vector<1x2x128xf32>
    %110 = vector.shape_cast %109 : vector<1x2x128xf32> to vector<2x128xf32>
    %cst_24 = arith.constant dense<0.000000e+00> : vector<2x128xf32>
    %111 = tpu.matmul %107, %0, %cst_24 {dimension_numbers = #tpu.dot_dimension_numbers<[1], [0], [0], [1], [0, 0, 1, 1], [], []>} : vector<2x32xf32>, vector<32x128xf32>, vector<2x128xf32> -> vector<2x128xf32>
    %112 = arith.addf %110, %111 : vector<2x128xf32>
    %113 = vector.extract_strided_slice %112 {offsets = [0, 0], sizes = [2, 96], strides = [1, 1]} : vector<2x128xf32> to vector<2x96xf32>
    %114 = arith.negf %113 : vector<2x96xf32>
    %115 = math.exp %114 : vector<2x96xf32>
    %cst_25 = arith.constant 1.000000e+00 : f32
    %116 = vector.broadcast %cst_25 : f32 to vector<2x96xf32>
    %117 = arith.addf %116, %115 : vector<2x96xf32>
    %118 = arith.divf %116, %117 : vector<2x96xf32>
    %119 = vector.extract_strided_slice %112 {offsets = [0, 96], sizes = [2, 32], strides = [1, 1]} : vector<2x128xf32> to vector<2x32xf32>
    %120 = math.tanh %119 : vector<2x32xf32>
    %121 = vector.extract_strided_slice %118 {offsets = [0, 0], sizes = [2, 32], strides = [1, 1]} : vector<2x96xf32> to vector<2x32xf32>
    %122 = vector.extract_strided_slice %118 {offsets = [0, 32], sizes = [2, 32], strides = [1, 1]} : vector<2x96xf32> to vector<2x32xf32>
    %123 = vector.extract_strided_slice %118 {offsets = [0, 64], sizes = [2, 32], strides = [1, 1]} : vector<2x96xf32> to vector<2x32xf32>
    %124 = arith.mulf %122, %105 : vector<2x32xf32>
    %125 = arith.mulf %121, %120 : vector<2x32xf32>
    %126 = arith.addf %124, %125 : vector<2x32xf32>
    %127 = math.tanh %126 : vector<2x32xf32>
    %128 = arith.mulf %123, %127 : vector<2x32xf32>
    %c6_i32 = arith.constant 6 : i32
    %129 = arith.index_cast %c6_i32 : i32 to index
    %c0_26 = arith.constant 0 : index
    %c0_27 = arith.constant 0 : index
    %130 = vector.load %arg1[%129, %c0_26, %c0_27] : memref<8x2x128xf32, #tpu.memory_space<vmem>>, vector<1x2x128xf32>
    %131 = vector.shape_cast %130 : vector<1x2x128xf32> to vector<2x128xf32>
    %cst_28 = arith.constant dense<0.000000e+00> : vector<2x128xf32>
    %132 = tpu.matmul %128, %0, %cst_28 {dimension_numbers = #tpu.dot_dimension_numbers<[1], [0], [0], [1], [0, 0, 1, 1], [], []>} : vector<2x32xf32>, vector<32x128xf32>, vector<2x128xf32> -> vector<2x128xf32>
    %133 = arith.addf %131, %132 : vector<2x128xf32>
    %134 = vector.extract_strided_slice %133 {offsets = [0, 0], sizes = [2, 96], strides = [1, 1]} : vector<2x128xf32> to vector<2x96xf32>
    %135 = arith.negf %134 : vector<2x96xf32>
    %136 = math.exp %135 : vector<2x96xf32>
    %cst_29 = arith.constant 1.000000e+00 : f32
    %137 = vector.broadcast %cst_29 : f32 to vector<2x96xf32>
    %138 = arith.addf %137, %136 : vector<2x96xf32>
    %139 = arith.divf %137, %138 : vector<2x96xf32>
    %140 = vector.extract_strided_slice %133 {offsets = [0, 96], sizes = [2, 32], strides = [1, 1]} : vector<2x128xf32> to vector<2x32xf32>
    %141 = math.tanh %140 : vector<2x32xf32>
    %142 = vector.extract_strided_slice %139 {offsets = [0, 0], sizes = [2, 32], strides = [1, 1]} : vector<2x96xf32> to vector<2x32xf32>
    %143 = vector.extract_strided_slice %139 {offsets = [0, 32], sizes = [2, 32], strides = [1, 1]} : vector<2x96xf32> to vector<2x32xf32>
    %144 = vector.extract_strided_slice %139 {offsets = [0, 64], sizes = [2, 32], strides = [1, 1]} : vector<2x96xf32> to vector<2x32xf32>
    %145 = arith.mulf %143, %126 : vector<2x32xf32>
    %146 = arith.mulf %142, %141 : vector<2x32xf32>
    %147 = arith.addf %145, %146 : vector<2x32xf32>
    %148 = math.tanh %147 : vector<2x32xf32>
    %149 = arith.mulf %144, %148 : vector<2x32xf32>
    %c7_i32 = arith.constant 7 : i32
    %150 = arith.index_cast %c7_i32 : i32 to index
    %c0_30 = arith.constant 0 : index
    %c0_31 = arith.constant 0 : index
    %151 = vector.load %arg1[%150, %c0_30, %c0_31] : memref<8x2x128xf32, #tpu.memory_space<vmem>>, vector<1x2x128xf32>
    %152 = vector.shape_cast %151 : vector<1x2x128xf32> to vector<2x128xf32>
    %cst_32 = arith.constant dense<0.000000e+00> : vector<2x128xf32>
    %153 = tpu.matmul %149, %0, %cst_32 {dimension_numbers = #tpu.dot_dimension_numbers<[1], [0], [0], [1], [0, 0, 1, 1], [], []>} : vector<2x32xf32>, vector<32x128xf32>, vector<2x128xf32> -> vector<2x128xf32>
    %154 = arith.addf %152, %153 : vector<2x128xf32>
    %155 = vector.extract_strided_slice %154 {offsets = [0, 0], sizes = [2, 96], strides = [1, 1]} : vector<2x128xf32> to vector<2x96xf32>
    %156 = arith.negf %155 : vector<2x96xf32>
    %157 = math.exp %156 : vector<2x96xf32>
    %cst_33 = arith.constant 1.000000e+00 : f32
    %158 = vector.broadcast %cst_33 : f32 to vector<2x96xf32>
    %159 = arith.addf %158, %157 : vector<2x96xf32>
    %160 = arith.divf %158, %159 : vector<2x96xf32>
    %161 = vector.extract_strided_slice %154 {offsets = [0, 96], sizes = [2, 32], strides = [1, 1]} : vector<2x128xf32> to vector<2x32xf32>
    %162 = math.tanh %161 : vector<2x32xf32>
    %163 = vector.extract_strided_slice %160 {offsets = [0, 0], sizes = [2, 32], strides = [1, 1]} : vector<2x96xf32> to vector<2x32xf32>
    %164 = vector.extract_strided_slice %160 {offsets = [0, 32], sizes = [2, 32], strides = [1, 1]} : vector<2x96xf32> to vector<2x32xf32>
    %165 = vector.extract_strided_slice %160 {offsets = [0, 64], sizes = [2, 32], strides = [1, 1]} : vector<2x96xf32> to vector<2x32xf32>
    %166 = arith.mulf %164, %147 : vector<2x32xf32>
    %167 = arith.mulf %163, %162 : vector<2x32xf32>
    %168 = arith.addf %166, %167 : vector<2x32xf32>
    %169 = math.tanh %168 : vector<2x32xf32>
    %170 = arith.mulf %165, %169 : vector<2x32xf32>
    %c8_i32 = arith.constant 8 : i32
    %c0_34 = arith.constant 0 : index
    %c0_35 = arith.constant 0 : index
    %171 = vector.load %arg2[%c0_34, %c0_35] : memref<2x4xf32, #tpu.memory_space<vmem>>, vector<2x4xf32>
    %c0_36 = arith.constant 0 : index
    %c0_37 = arith.constant 0 : index
    %172 = vector.load %arg4[%c0_36, %c0_37] : memref<4x32xf32, #tpu.memory_space<vmem>>, vector<4x32xf32>
    %cst_38 = arith.constant dense<0.000000e+00> : vector<2x32xf32>
    %173 = tpu.matmul %171, %172, %cst_38 {dimension_numbers = #tpu.dot_dimension_numbers<[1], [0], [0], [1], [0, 0, 1, 1], [], []>} : vector<2x4xf32>, vector<4x32xf32>, vector<2x32xf32> -> vector<2x32xf32>
    %c0_39 = arith.constant 0 : index
    %c0_40 = arith.constant 0 : index
    %174 = vector.load %arg5[%c0_39, %c0_40] : memref<1x32xf32, #tpu.memory_space<vmem>>, vector<1x32xf32>
    %175 = vector.broadcast %174 : vector<1x32xf32> to vector<2x32xf32>
    %176 = arith.addf %173, %175 : vector<2x32xf32>
    %cst_41 = arith.constant 0.000000e+00 : f32
    %177 = vector.broadcast %cst_41 : f32 to vector<2x32xf32>
    %178 = arith.maximumf %176, %177 : vector<2x32xf32>
    %c0_42 = arith.constant 0 : index
    %c0_43 = arith.constant 0 : index
    %179 = vector.load %arg6[%c0_42, %c0_43] : memref<32x2xf32, #tpu.memory_space<vmem>>, vector<32x2xf32>
    %cst_44 = arith.constant dense<0.000000e+00> : vector<2x2xf32>
    %180 = tpu.matmul %170, %179, %cst_44 {dimension_numbers = #tpu.dot_dimension_numbers<[1], [0], [0], [1], [0, 0, 1, 1], [], []>} : vector<2x32xf32>, vector<32x2xf32>, vector<2x2xf32> -> vector<2x2xf32>
    %c0_45 = arith.constant 0 : index
    %c0_46 = arith.constant 0 : index
    %181 = vector.load %arg7[%c0_45, %c0_46] : memref<32x2xf32, #tpu.memory_space<vmem>>, vector<32x2xf32>
    %cst_47 = arith.constant dense<0.000000e+00> : vector<2x2xf32>
    %182 = tpu.matmul %178, %181, %cst_47 {dimension_numbers = #tpu.dot_dimension_numbers<[1], [0], [0], [1], [0, 0, 1, 1], [], []>} : vector<2x32xf32>, vector<32x2xf32>, vector<2x2xf32> -> vector<2x2xf32>
    %183 = arith.addf %180, %182 : vector<2x2xf32>
    %c0_48 = arith.constant 0 : index
    %c0_49 = arith.constant 0 : index
    %184 = vector.load %arg8[%c0_48, %c0_49] : memref<1x2xf32, #tpu.memory_space<vmem>>, vector<1x2xf32>
    %185 = vector.broadcast %184 : vector<1x2xf32> to vector<2x2xf32>
    %186 = arith.addf %183, %185 : vector<2x2xf32>
    %c0_50 = arith.constant 0 : index
    %c0_51 = arith.constant 0 : index
    %187 = vector.load %arg9[%c0_50, %c0_51] : memref<2x2xf32, #tpu.memory_space<vmem>>, vector<2x2xf32>
    tpu.vector_store %arg9[%c0_50, %c0_51], %186 {strides = array<i32>} : memref<2x2xf32, #tpu.memory_space<vmem>>, vector<2x2xf32>,
    return
  }
  func.func @transform_0(%arg0: i32) -> (i32, i32, i32) {
    %c0_i32 = arith.constant 0 : i32
    %c0_i32_0 = arith.constant 0 : i32
    %c0_i32_1 = arith.constant 0 : i32
    return %c0_i32, %arg0, %c0_i32_0 : i32, i32, i32
  }
  func.func @transform_1(%arg0: i32) -> (i32, i32) {
    %c0_i32 = arith.constant 0 : i32
    %c0_i32_0 = arith.constant 0 : i32
    return %arg0, %c0_i32 : i32, i32
  }
  func.func @transform_2(%arg0: i32) -> (i32, i32) {
    %c0_i32 = arith.constant 0 : i32
    %c0_i32_0 = arith.constant 0 : i32
    %c0_i32_1 = arith.constant 0 : i32
    return %c0_i32, %c0_i32_0 : i32, i32
  }
  func.func @transform_3(%arg0: i32) -> (i32, i32) {
    %c0_i32 = arith.constant 0 : i32
    %c0_i32_0 = arith.constant 0 : i32
    %c0_i32_1 = arith.constant 0 : i32
    return %c0_i32, %c0_i32_0 : i32, i32
  }
  func.func @transform_4(%arg0: i32) -> (i32, i32) {
    %c0_i32 = arith.constant 0 : i32
    %c0_i32_0 = arith.constant 0 : i32
    %c0_i32_1 = arith.constant 0 : i32
    return %c0_i32, %c0_i32_0 : i32, i32
  }
  func.func @transform_5(%arg0: i32) -> (i32, i32) {
    %c0_i32 = arith.constant 0 : i32
    %c0_i32_0 = arith.constant 0 : i32
    %c0_i32_1 = arith.constant 0 : i32
    return %c0_i32, %c0_i32_0 : i32, i32
  }
  func.func @transform_6(%arg0: i32) -> (i32, i32) {
    %c0_i32 = arith.constant 0 : i32
    %c0_i32_0 = arith.constant 0 : i32
    %c0_i32_1 = arith.constant 0 : i32
    return %c0_i32, %c0_i32_0 : i32, i32
  }
  func.func @transform_7(%arg0: i32) -> (i32, i32) {
    %c0_i32 = arith.constant 0 : i32
    %c0_i32_0 = arith.constant 0 : i32
    %c0_i32_1 = arith.constant 0 : i32
    return %c0_i32, %c0_i32_0 : i32, i32
  }
  func.func @transform_8(%arg0: i32) -> (i32, i32) {
    %c0_i32 = arith.constant 0 : i32
    %c0_i32_0 = arith.constant 0 : i32
    return %arg0, %c0_i32 : i32, i32
  }
}

</mosaic_0001>

<llo_original>
// kernel: sequence_nn_forward.1
$region0: #{sequence_nn_forward.1}
  #allocation0 [shape = 'u32[]', space=smem, size = 0x4, offset = 0x4, fixed_abs, tag = 'smem constant byte address 0x4 - core index']
  #allocation1 [shape = 'u32[144,128]{1,0:T(1,128)}', space=vmem, size = 0x12000, scoped, tag = 'internal scratch']
  %s0 = inlined_call_operand.vmem [shape: f32[8,2,128], index: 0, kind: input, shape index: {}]
  %s1 = inlined_call_operand.vmem [shape: f32[2,4], index: 1, kind: input, shape index: {}]
  %s2 = inlined_call_operand.vmem [shape: f32[32,128], index: 2, kind: input, shape index: {}]
  %s3 = inlined_call_operand.vmem [shape: f32[4,32], index: 3, kind: input, shape index: {}]
  %s4 = inlined_call_operand.vmem [shape: f32[1,32], index: 4, kind: input, shape index: {}]
  %s5 = inlined_call_operand.vmem [shape: f32[32,2], index: 5, kind: input, shape index: {}]
  %s6 = inlined_call_operand.vmem [shape: f32[32,2], index: 6, kind: input, shape index: {}]
  %s7 = inlined_call_operand.vmem [shape: f32[1,2], index: 7, kind: input, shape index: {}]
  %s8 = inlined_call_operand.hbm [shape: f32[2,2], index: 8, kind: output, shape index: {}]
  %s9 = sld [smem:[#allocation0]]
  $region42: #{sequence_nn_forward.1} parent=0
    _
  %s11 = ssub.s32 1, %s9
  %s12 = scalar_select 0, %s11, %s9
  $region1: #{sequence_nn_forward.1} parent=0
    #allocation2 [shape = 'u8[1024]{0}', space=vmem, size = 0x400, scoped, tag = 'output window, operand 0, single buffered']
    #allocation3 [shape = 's32[1]{0}', space=sflag, size = 0x4, scoped, tag = 'scoped memory for sequence_nn_forward.1']
    %13 = vsyncpa [#allocation3], 0
    // Predicated region
    $region2: #{sequence_nn_forward.1} parent=1 // pred_check
      _
    $region3: #{sequence_nn_forward.1} parent=1 // pred_check_branch
      %15 = sbr.rel (0) target = $region5
    $region4: #{sequence_nn_forward.1} parent=1 // pred_region
      _
    $region5: #{sequence_nn_forward.1} parent=1 // pred_fallthru
      _
    // Predicated region
    $region6: #{sequence_nn_forward.1} parent=1 // pred_check
      _
    $region7: #{sequence_nn_forward.1} parent=1 // pred_check_branch
      %17 = sbr.rel (0) target = $region9
    $region8: #{sequence_nn_forward.1} parent=1 // pred_region
      _
    $region9: #{sequence_nn_forward.1} parent=1 // pred_fallthru
      _
    // Predicated region
    $region10: #{sequence_nn_forward.1} parent=1 // pred_check
      _
    $region11: #{sequence_nn_forward.1} parent=1 // pred_check_branch
      %19 = sbr.rel (0) target = $region13
    $region12: #{sequence_nn_forward.1} parent=1 // pred_region
      _
    $region13: #{sequence_nn_forward.1} parent=1 // pred_fallthru
      _
    // Predicated region
    $region14: #{sequence_nn_forward.1} parent=1 // pred_check
      _
    $region15: #{sequence_nn_forward.1} parent=1 // pred_check_branch
      %21 = sbr.rel (0) target = $region17
    $region16: #{sequence_nn_forward.1} parent=1 // pred_region
      _
    $region17: #{sequence_nn_forward.1} parent=1 // pred_fallthru
      _
    // Predicated region
    $region18: #{sequence_nn_forward.1} parent=1 // pred_check
      _
    $region19: #{sequence_nn_forward.1} parent=1 // pred_check_branch
      %23 = sbr.rel (0) target = $region21
    $region20: #{sequence_nn_forward.1} parent=1 // pred_region
      _
    $region21: #{sequence_nn_forward.1} parent=1 // pred_fallthru
      _
    // Predicated region
    $region22: #{sequence_nn_forward.1} parent=1 // pred_check
      _
    $region23: #{sequence_nn_forward.1} parent=1 // pred_check_branch
      %25 = sbr.rel (0) target = $region25
    $region24: #{sequence_nn_forward.1} parent=1 // pred_region
      _
    $region25: #{sequence_nn_forward.1} parent=1 // pred_fallthru
      _
    // Predicated region
    $region26: #{sequence_nn_forward.1} parent=1 // pred_check
      _
    $region27: #{sequence_nn_forward.1} parent=1 // pred_check_branch
      %27 = sbr.rel (0) target = $region29
    $region28: #{sequence_nn_forward.1} parent=1 // pred_region
      _
    $region29: #{sequence_nn_forward.1} parent=1 // pred_fallthru
      _
    // Predicated region
    $region30: #{sequence_nn_forward.1} parent=1 // pred_check
      _
    $region31: #{sequence_nn_forward.1} parent=1 // pred_check_branch
      %29 = sbr.rel (0) target = $region33
    $region32: #{sequence_nn_forward.1} parent=1 // pred_region
      _
    $region33: #{sequence_nn_forward.1} parent=1 // pred_fallthru
      _
    %v30 = vld [vmem:[%s2] sm:$0xff]
    %v31 = vld [vmem:[%s2 + $0x8] sm:$0xff]
    %v32 = vld [vmem:[%s2 + $0x10] sm:$0xff]
    %v33 = vld [vmem:[%s2 + $0x18] sm:$0xff]
    %v34 = vld [vmem:[%s0] sm:$0x3]
    %vm35 = vcmask 261120
    %v37 = vsel %vm35, 0.0, 0
    %39 = vmatprep.subr.mxu0 0.0
    %40 = vmatpush1.msra.mxu0 0.0
    %41 = vmatprep.subr.mxu0 0.0
    %42 = vmatpush1.msra.mxu0 0.0
    %43 = vmatprep.subr.mxu0 0.0
    %44 = vmatpush1.msra.mxu0 0.0
    %45 = vmatprep.subr.mxu0 0.0
    %46 = vmatpush1.msra.mxu0 0.0
    %47 = vmatprep.subr.mxu0 0.0
    %48 = vmatpush1.msra.mxu0 0.0
    %49 = vmatprep.subr.mxu0 0.0
    %50 = vmatpush1.msra.mxu0 0.0
    %51 = vmatprep.subr.mxu0 0.0
    %52 = vmatpush1.msra.mxu0 0.0
    %53 = vmatprep.subr.mxu0 0.0
    %54 = vmatpush1.msra.mxu0 0.0
    %55 = vmatprep.subr.mxu0 0.0
    %56 = vmatpush1.msra.mxu0 0.0
    %57 = vmatprep.subr.mxu0 0.0
    %58 = vmatpush1.msra.mxu0 0.0
    %59 = vmatprep.subr.mxu0 0.0
    %60 = vmatpush1.msra.mxu0 0.0
    %61 = vmatprep.subr.mxu0 0.0
    %62 = vmatpush1.msra.mxu0 0.0
    %63 = vmatprep.subr.mxu0 0.0
    %64 = vmatpush1.msra.mxu0 %v33
    %65 = vmatprep.subr.mxu0 0.0
    %66 = vmatpush1.msra.mxu0 %v32
    %67 = vmatprep.subr.mxu0 0.0
    %68 = vmatpush1.msra.mxu0 %v31
    %69 = vmatprep.subr.mxu0 0.0
    %70 = vmatpush1.msra.mxu0 %v30
    %71 = vmatprep.subr.mxu0 0.0
    %72 = vmatpush2.msra.mxu0 0.0
    %73 = vmatprep.subr.mxu0 0.0
    %74 = vmatpush2.msra.mxu0 0.0
    %75 = vmatprep.subr.mxu0 0.0
    %76 = vmatpush2.msra.mxu0 0.0
    %77 = vmatprep.subr.mxu0 0.0
    %78 = vmatpush2.msra.mxu0 0.0
    %79 = vmatprep.subr.mxu0 0.0
    %80 = vmatpush2.msra.mxu0 0.0
    %81 = vmatprep.subr.mxu0 0.0
    %82 = vmatpush2.msra.mxu0 0.0
    %83 = vmatprep.subr.mxu0 0.0
    %84 = vmatpush2.msra.mxu0 0.0
    %85 = vmatprep.subr.mxu0 0.0
    %86 = vmatpush2.msra.mxu0 0.0
    %87 = vmatprep.subr.mxu0 0.0
    %88 = vmatpush2.msra.mxu0 0.0
    %89 = vmatprep.subr.mxu0 0.0
    %90 = vmatpush2.msra.mxu0 0.0
    %91 = vmatprep.subr.mxu0 0.0
    %92 = vmatpush2.msra.mxu0 0.0
    %93 = vmatprep.subr.mxu0 0.0
    %94 = vmatpush2.msra.mxu0 0.0
    %95 = vmatprep.subr.mxu0 0.0
    %96 = vmatpush2.msra.mxu0 0.0
    %97 = vmatprep.subr.mxu0 0.0
    %98 = vmatpush2.msra.mxu0 0.0
    %99 = vmatprep.subr.mxu0 0.0
    %100 = vmatpush2.msra.mxu0 0.0
    %101 = vmatprep.subr.mxu0 0.0
    %102 = vmatpush2.msra.mxu0 0.0
    %103 = vmatprep.mubr.f32.mxu0 0.0
    %104 = vmatmul.mubr.f32.gmra.mxu0 %v37
    %v105 = vpop.f32.mrf.mxu0
    %v106 = vadd.f32 0.0, %v105
    %v107 = vpop.f32.mrf.mxu0
    %108 = vdwg.mxu0
    %v109 = vadd.f32 %v34, %v106
    %v110 = vxor.u32 %v109, 2147483648
    %v111 = vmul.f32 %v110, 1.442695
    %v112 = vpow.pop %v111
    %v113 = vadd.f32 %v112, 1.0
    %v114 = vrcp.pop %v113
    %v115 = vmul.f32 1.0, %v114
    %v116 = vtanh.pop %v109
    %v117 = vmul.f32 %v115, 0.0
    %119 = vrot.lane.b32.xlu0 %v116, 32
    %v120 = vpop.permute.xlu0 %119
    %v122 = vmul.f32 %v115, %v120
    %124 = vrot.lane.b32.xlu0 %v122, 32
    %v125 = vpop.permute.xlu0 %124
    %v127 = vadd.f32 %v117, %v125
    %v128 = vtanh.pop %v127
    %130 = vrot.lane.b32.xlu0 %v128, 32
    %v131 = vpop.permute.xlu0 %130
    %v133 = vmul.f32 %v115, %v131
    %s134 = scalar_lea.vmem %s0, 2
    %v135 = vld [vmem:[%s134] sm:$0x3]
    %137 = vrot.lane.b32.xlu0 %v133, 64
    %v138 = vpop.permute.xlu0 %137
    %v139 = vsel %vm35, %v138, 0
    %141 = vmatprep.subr.mxu0 0.0
    %142 = vmatpush1.msra.mxu0 0.0
    %143 = vmatprep.subr.mxu0 0.0
    %144 = vmatpush1.msra.mxu0 0.0
    %145 = vmatprep.subr.mxu0 0.0
    %146 = vmatpush1.msra.mxu0 0.0
    %147 = vmatprep.subr.mxu0 0.0
    %148 = vmatpush1.msra.mxu0 0.0
    %149 = vmatprep.subr.mxu0 0.0
    %150 = vmatpush1.msra.mxu0 0.0
    %151 = vmatprep.subr.mxu0 0.0
    %152 = vmatpush1.msra.mxu0 0.0
    %153 = vmatprep.subr.mxu0 0.0
    %154 = vmatpush1.msra.mxu0 0.0
    %155 = vmatprep.subr.mxu0 0.0
    %156 = vmatpush1.msra.mxu0 0.0
    %157 = vmatprep.subr.mxu0 0.0
    %158 = vmatpush1.msra.mxu0 0.0
    %159 = vmatprep.subr.mxu0 0.0
    %160 = vmatpush1.msra.mxu0 0.0
    %161 = vmatprep.subr.mxu0 0.0
    %162 = vmatpush1.msra.mxu0 0.0
    %163 = vmatprep.subr.mxu0 0.0
    %164 = vmatpush1.msra.mxu0 0.0
    %165 = vmatprep.subr.mxu0 0.0
    %166 = vmatpush1.msra.mxu0 %v33
    %167 = vmatprep.subr.mxu0 0.0
    %168 = vmatpush1.msra.mxu0 %v32
    %169 = vmatprep.subr.mxu0 0.0
    %170 = vmatpush1.msra.mxu0 %v31
    %171 = vmatprep.subr.mxu0 0.0
    %172 = vmatpush1.msra.mxu0 %v30
    %173 = vmatprep.subr.mxu0 0.0
    %174 = vmatpush2.msra.mxu0 0.0
    %175 = vmatprep.subr.mxu0 0.0
    %176 = vmatpush2.msra.mxu0 0.0
    %177 = vmatprep.subr.mxu0 0.0
    %178 = vmatpush2.msra.mxu0 0.0
    %179 = vmatprep.subr.mxu0 0.0
    %180 = vmatpush2.msra.mxu0 0.0
    %181 = vmatprep.subr.mxu0 0.0
    %182 = vmatpush2.msra.mxu0 0.0
    %183 = vmatprep.subr.mxu0 0.0
    %184 = vmatpush2.msra.mxu0 0.0
    %185 = vmatprep.subr.mxu0 0.0
    %186 = vmatpush2.msra.mxu0 0.0
    %187 = vmatprep.subr.mxu0 0.0
    %188 = vmatpush2.msra.mxu0 0.0
    %189 = vmatprep.subr.mxu0 0.0
    %190 = vmatpush2.msra.mxu0 0.0
    %191 = vmatprep.subr.mxu0 0.0
    %192 = vmatpush2.msra.mxu0 0.0
    %193 = vmatprep.subr.mxu0 0.0
    %194 = vmatpush2.msra.mxu0 0.0
    %195 = vmatprep.subr.mxu0 0.0
    %196 = vmatpush2.msra.mxu0 0.0
    %197 = vmatprep.subr.mxu0 0.0
    %198 = vmatpush2.msra.mxu0 0.0
    %199 = vmatprep.subr.mxu0 0.0
    %200 = vmatpush2.msra.mxu0 0.0
    %201 = vmatprep.subr.mxu0 0.0
    %202 = vmatpush2.msra.mxu0 0.0
    %203 = vmatprep.subr.mxu0 0.0
    %204 = vmatpush2.msra.mxu0 0.0
    %205 = vmatprep.mubr.f32.mxu0 0.0
    %206 = vmatmul.mubr.f32.gmra.mxu0 %v139
    %v207 = vpop.f32.mrf.mxu0
    %v208 = vadd.f32 0.0, %v207
    %v209 = vpop.f32.mrf.mxu0
    %210 = vdwg.mxu0
    %v211 = vadd.f32 %v135, %v208
    %v212 = vxor.u32 %v211, 2147483648
    %v213 = vmul.f32 %v212, 1.442695
    %v214 = vpow.pop %v213
    %v215 = vadd.f32 %v214, 1.0
    %v216 = vrcp.pop %v215
    %v217 = vmul.f32 1.0, %v216
    %v218 = vtanh.pop %v211
    %v219 = vmul.f32 %v217, %v127
    %221 = vrot.lane.b32.xlu0 %v218, 32
    %v222 = vpop.permute.xlu0 %221
    %v224 = vmul.f32 %v217, %v222
    %226 = vrot.lane.b32.xlu0 %v224, 32
    %v227 = vpop.permute.xlu0 %226
    %v229 = vadd.f32 %v219, %v227
    %v230 = vtanh.pop %v229
    %232 = vrot.lane.b32.xlu0 %v230, 32
    %v233 = vpop.permute.xlu0 %232
    %v235 = vmul.f32 %v217, %v233
    %s236 = scalar_lea.vmem %s0, 4
    %v237 = vld [vmem:[%s236] sm:$0x3]
    %239 = vrot.lane.b32.xlu0 %v235, 64
    %v240 = vpop.permute.xlu0 %239
    %v241 = vsel %vm35, %v240, 0
    %243 = vmatprep.subr.mxu0 0.0
    %244 = vmatpush1.msra.mxu0 0.0
    %245 = vmatprep.subr.mxu0 0.0
    %246 = vmatpush1.msra.mxu0 0.0
    %247 = vmatprep.subr.mxu0 0.0
    %248 = vmatpush1.msra.mxu0 0.0
    %249 = vmatprep.subr.mxu0 0.0
    %250 = vmatpush1.msra.mxu0 0.0
    %251 = vmatprep.subr.mxu0 0.0
    %252 = vmatpush1.msra.mxu0 0.0
    %253 = vmatprep.subr.mxu0 0.0
    %254 = vmatpush1.msra.mxu0 0.0
    %255 = vmatprep.subr.mxu0 0.0
    %256 = vmatpush1.msra.mxu0 0.0
    %257 = vmatprep.subr.mxu0 0.0
    %258 = vmatpush1.msra.mxu0 0.0
    %259 = vmatprep.subr.mxu0 0.0
    %260 = vmatpush1.msra.mxu0 0.0
    %261 = vmatprep.subr.mxu0 0.0
    %262 = vmatpush1.msra.mxu0 0.0
    %263 = vmatprep.subr.mxu0 0.0
    %264 = vmatpush1.msra.mxu0 0.0
    %265 = vmatprep.subr.mxu0 0.0
    %266 = vmatpush1.msra.mxu0 0.0
    %267 = vmatprep.subr.mxu0 0.0
    %268 = vmatpush1.msra.mxu0 %v33
    %269 = vmatprep.subr.mxu0 0.0
    %270 = vmatpush1.msra.mxu0 %v32
    %271 = vmatprep.subr.mxu0 0.0
    %272 = vmatpush1.msra.mxu0 %v31
    %273 = vmatprep.subr.mxu0 0.0
    %274 = vmatpush1.msra.mxu0 %v30
    %275 = vmatprep.subr.mxu0 0.0
    %276 = vmatpush2.msra.mxu0 0.0
    %277 = vmatprep.subr.mxu0 0.0
    %278 = vmatpush2.msra.mxu0 0.0
    %279 = vmatprep.subr.mxu0 0.0
    %280 = vmatpush2.msra.mxu0 0.0
    %281 = vmatprep.subr.mxu0 0.0
    %282 = vmatpush2.msra.mxu0 0.0
    %283 = vmatprep.subr.mxu0 0.0
    %284 = vmatpush2.msra.mxu0 0.0
    %285 = vmatprep.subr.mxu0 0.0
    %286 = vmatpush2.msra.mxu0 0.0
    %287 = vmatprep.subr.mxu0 0.0
    %288 = vmatpush2.msra.mxu0 0.0
    %289 = vmatprep.subr.mxu0 0.0
    %290 = vmatpush2.msra.mxu0 0.0
    %291 = vmatprep.subr.mxu0 0.0
    %292 = vmatpush2.msra.mxu0 0.0
    %293 = vmatprep.subr.mxu0 0.0
    %294 = vmatpush2.msra.mxu0 0.0
    %295 = vmatprep.subr.mxu0 0.0
    %296 = vmatpush2.msra.mxu0 0.0
    %297 = vmatprep.subr.mxu0 0.0
    %298 = vmatpush2.msra.mxu0 0.0
    %299 = vmatprep.subr.mxu0 0.0
    %300 = vmatpush2.msra.mxu0 0.0
    %301 = vmatprep.subr.mxu0 0.0
    %302 = vmatpush2.msra.mxu0 0.0
    %303 = vmatprep.subr.mxu0 0.0
    %304 = vmatpush2.msra.mxu0 0.0
    %305 = vmatprep.subr.mxu0 0.0
    %306 = vmatpush2.msra.mxu0 0.0
    %307 = vmatprep.mubr.f32.mxu0 0.0
    %308 = vmatmul.mubr.f32.gmra.mxu0 %v241
    %v309 = vpop.f32.mrf.mxu0
    %v310 = vadd.f32 0.0, %v309
    %v311 = vpop.f32.mrf.mxu0
    %312 = vdwg.mxu0
    %v313 = vadd.f32 %v237, %v310
    %v314 = vxor.u32 %v313, 2147483648
    %v315 = vmul.f32 %v314, 1.442695
    %v316 = vpow.pop %v315
    %v317 = vadd.f32 %v316, 1.0
    %v318 = vrcp.pop %v317
    %v319 = vmul.f32 1.0, %v318
    %v320 = vtanh.pop %v313
    %v321 = vmul.f32 %v319, %v229
    %323 = vrot.lane.b32.xlu0 %v320, 32
    %v324 = vpop.permute.xlu0 %323
    %v326 = vmul.f32 %v319, %v324
    %328 = vrot.lane.b32.xlu0 %v326, 32
    %v329 = vpop.permute.xlu0 %328
    %v331 = vadd.f32 %v321, %v329
    %v332 = vtanh.pop %v331
    %334 = vrot.lane.b32.xlu0 %v332, 32
    %v335 = vpop.permute.xlu0 %334
    %v337 = vmul.f32 %v319, %v335
    %s338 = scalar_lea.vmem %s0, 6
    %v339 = vld [vmem:[%s338] sm:$0x3]
    %341 = vrot.lane.b32.xlu0 %v337, 64
    %v342 = vpop.permute.xlu0 %341
    %v343 = vsel %vm35, %v342, 0
    %345 = vmatprep.subr.mxu0 0.0
    %346 = vmatpush1.msra.mxu0 0.0
    %347 = vmatprep.subr.mxu0 0.0
    %348 = vmatpush1.msra.mxu0 0.0
    %349 = vmatprep.subr.mxu0 0.0
    %350 = vmatpush1.msra.mxu0 0.0
    %351 = vmatprep.subr.mxu0 0.0
    %352 = vmatpush1.msra.mxu0 0.0
    %353 = vmatprep.subr.mxu0 0.0
    %354 = vmatpush1.msra.mxu0 0.0
    %355 = vmatprep.subr.mxu0 0.0
    %356 = vmatpush1.msra.mxu0 0.0
    %357 = vmatprep.subr.mxu0 0.0
    %358 = vmatpush1.msra.mxu0 0.0
    %359 = vmatprep.subr.mxu0 0.0
    %360 = vmatpush1.msra.mxu0 0.0
    %361 = vmatprep.subr.mxu0 0.0
    %362 = vmatpush1.msra.mxu0 0.0
    %363 = vmatprep.subr.mxu0 0.0
    %364 = vmatpush1.msra.mxu0 0.0
    %365 = vmatprep.subr.mxu0 0.0
    %366 = vmatpush1.msra.mxu0 0.0
    %367 = vmatprep.subr.mxu0 0.0
    %368 = vmatpush1.msra.mxu0 0.0
    %369 = vmatprep.subr.mxu0 0.0
    %370 = vmatpush1.msra.mxu0 %v33
    %371 = vmatprep.subr.mxu0 0.0
    %372 = vmatpush1.msra.mxu0 %v32
    %373 = vmatprep.subr.mxu0 0.0
    %374 = vmatpush1.msra.mxu0 %v31
    %375 = vmatprep.subr.mxu0 0.0
    %376 = vmatpush1.msra.mxu0 %v30
    %377 = vmatprep.subr.mxu0 0.0
    %378 = vmatpush2.msra.mxu0 0.0
    %379 = vmatprep.subr.mxu0 0.0
    %380 = vmatpush2.msra.mxu0 0.0
    %381 = vmatprep.subr.mxu0 0.0
    %382 = vmatpush2.msra.mxu0 0.0
    %383 = vmatprep.subr.mxu0 0.0
    %384 = vmatpush2.msra.mxu0 0.0
    %385 = vmatprep.subr.mxu0 0.0
    %386 = vmatpush2.msra.mxu0 0.0
    %387 = vmatprep.subr.mxu0 0.0
    %388 = vmatpush2.msra.mxu0 0.0
    %389 = vmatprep.subr.mxu0 0.0
    %390 = vmatpush2.msra.mxu0 0.0
    %391 = vmatprep.subr.mxu0 0.0
    %392 = vmatpush2.msra.mxu0 0.0
    %393 = vmatprep.subr.mxu0 0.0
    %394 = vmatpush2.msra.mxu0 0.0
    %395 = vmatprep.subr.mxu0 0.0
    %396 = vmatpush2.msra.mxu0 0.0
    %397 = vmatprep.subr.mxu0 0.0
    %398 = vmatpush2.msra.mxu0 0.0
    %399 = vmatprep.subr.mxu0 0.0
    %400 = vmatpush2.msra.mxu0 0.0
    %401 = vmatprep.subr.mxu0 0.0
    %402 = vmatpush2.msra.mxu0 0.0
    %403 = vmatprep.subr.mxu0 0.0
    %404 = vmatpush2.msra.mxu0 0.0
    %405 = vmatprep.subr.mxu0 0.0
    %406 = vmatpush2.msra.mxu0 0.0
    %407 = vmatprep.subr.mxu0 0.0
    %408 = vmatpush2.msra.mxu0 0.0
    %409 = vmatprep.mubr.f32.mxu0 0.0
    %410 = vmatmul.mubr.f32.gmra.mxu0 %v343
    %v411 = vpop.f32.mrf.mxu0
    %v412 = vadd.f32 0.0, %v411
    %v413 = vpop.f32.mrf.mxu0
    %414 = vdwg.mxu0
    %v415 = vadd.f32 %v339, %v412
    %v416 = vxor.u32 %v415, 2147483648
    %v417 = vmul.f32 %v416, 1.442695
    %v418 = vpow.pop %v417
    %v419 = vadd.f32 %v418, 1.0
    %v420 = vrcp.pop %v419
    %v421 = vmul.f32 1.0, %v420
    %v422 = vtanh.pop %v415
    %v423 = vmul.f32 %v421, %v331
    %425 = vrot.lane.b32.xlu0 %v422, 32
    %v426 = vpop.permute.xlu0 %425
    %v428 = vmul.f32 %v421, %v426
    %430 = vrot.lane.b32.xlu0 %v428, 32
    %v431 = vpop.permute.xlu0 %430
    %v433 = vadd.f32 %v423, %v431
    %v434 = vtanh.pop %v433
    %436 = vrot.lane.b32.xlu0 %v434, 32
    %v437 = vpop.permute.xlu0 %436
    %v439 = vmul.f32 %v421, %v437
    %s440 = scalar_lea.vmem %s0, 8
    %v441 = vld [vmem:[%s440] sm:$0x3]
    %443 = vrot.lane.b32.xlu0 %v439, 64
    %v444 = vpop.permute.xlu0 %443
    %v445 = vsel %vm35, %v444, 0
    %447 = vmatprep.subr.mxu0 0.0
    %448 = vmatpush1.msra.mxu0 0.0
    %449 = vmatprep.subr.mxu0 0.0
    %450 = vmatpush1.msra.mxu0 0.0
    %451 = vmatprep.subr.mxu0 0.0
    %452 = vmatpush1.msra.mxu0 0.0
    %453 = vmatprep.subr.mxu0 0.0
    %454 = vmatpush1.msra.mxu0 0.0
    %455 = vmatprep.subr.mxu0 0.0
    %456 = vmatpush1.msra.mxu0 0.0
    %457 = vmatprep.subr.mxu0 0.0
    %458 = vmatpush1.msra.mxu0 0.0
    %459 = vmatprep.subr.mxu0 0.0
    %460 = vmatpush1.msra.mxu0 0.0
    %461 = vmatprep.subr.mxu0 0.0
    %462 = vmatpush1.msra.mxu0 0.0
    %463 = vmatprep.subr.mxu0 0.0
    %464 = vmatpush1.msra.mxu0 0.0
    %465 = vmatprep.subr.mxu0 0.0
    %466 = vmatpush1.msra.mxu0 0.0
    %467 = vmatprep.subr.mxu0 0.0
    %468 = vmatpush1.msra.mxu0 0.0
    %469 = vmatprep.subr.mxu0 0.0
    %470 = vmatpush1.msra.mxu0 0.0
    %471 = vmatprep.subr.mxu0 0.0
    %472 = vmatpush1.msra.mxu0 %v33
    %473 = vmatprep.subr.mxu0 0.0
    %474 = vmatpush1.msra.mxu0 %v32
    %475 = vmatprep.subr.mxu0 0.0
    %476 = vmatpush1.msra.mxu0 %v31
    %477 = vmatprep.subr.mxu0 0.0
    %478 = vmatpush1.msra.mxu0 %v30
    %479 = vmatprep.subr.mxu0 0.0
    %480 = vmatpush2.msra.mxu0 0.0
    %481 = vmatprep.subr.mxu0 0.0
    %482 = vmatpush2.msra.mxu0 0.0
    %483 = vmatprep.subr.mxu0 0.0
    %484 = vmatpush2.msra.mxu0 0.0
    %485 = vmatprep.subr.mxu0 0.0
    %486 = vmatpush2.msra.mxu0 0.0
    %487 = vmatprep.subr.mxu0 0.0
    %488 = vmatpush2.msra.mxu0 0.0
    %489 = vmatprep.subr.mxu0 0.0
    %490 = vmatpush2.msra.mxu0 0.0
    %491 = vmatprep.subr.mxu0 0.0
    %492 = vmatpush2.msra.mxu0 0.0
    %493 = vmatprep.subr.mxu0 0.0
    %494 = vmatpush2.msra.mxu0 0.0
    %495 = vmatprep.subr.mxu0 0.0
    %496 = vmatpush2.msra.mxu0 0.0
    %497 = vmatprep.subr.mxu0 0.0
    %498 = vmatpush2.msra.mxu0 0.0
    %499 = vmatprep.subr.mxu0 0.0
    %500 = vmatpush2.msra.mxu0 0.0
    %501 = vmatprep.subr.mxu0 0.0
    %502 = vmatpush2.msra.mxu0 0.0
    %503 = vmatprep.subr.mxu0 0.0
    %504 = vmatpush2.msra.mxu0 0.0
    %505 = vmatprep.subr.mxu0 0.0
    %506 = vmatpush2.msra.mxu0 0.0
    %507 = vmatprep.subr.mxu0 0.0
    %508 = vmatpush2.msra.mxu0 0.0
    %509 = vmatprep.subr.mxu0 0.0
    %510 = vmatpush2.msra.mxu0 0.0
    %511 = vmatprep.mubr.f32.mxu0 0.0
    %512 = vmatmul.mubr.f32.gmra.mxu0 %v445
    %v513 = vpop.f32.mrf.mxu0
    %v514 = vadd.f32 0.0, %v513
    %v515 = vpop.f32.mrf.mxu0
    %516 = vdwg.mxu0
    %v517 = vadd.f32 %v441, %v514
    %v518 = vxor.u32 %v517, 2147483648
    %v519 = vmul.f32 %v518, 1.442695
    %v520 = vpow.pop %v519
    %v521 = vadd.f32 %v520, 1.0
    %v522 = vrcp.pop %v521
    %v523 = vmul.f32 1.0, %v522
    %v524 = vtanh.pop %v517
    %v525 = vmul.f32 %v523, %v433
    %527 = vrot.lane.b32.xlu0 %v524, 32
    %v528 = vpop.permute.xlu0 %527
    %v530 = vmul.f32 %v523, %v528
    %532 = vrot.lane.b32.xlu0 %v530, 32
    %v533 = vpop.permute.xlu0 %532
    %v535 = vadd.f32 %v525, %v533
    %v536 = vtanh.pop %v535
    %538 = vrot.lane.b32.xlu0 %v536, 32
    %v539 = vpop.permute.xlu0 %538
    %v541 = vmul.f32 %v523, %v539
    %s542 = scalar_lea.vmem %s0, 10
    %v543 = vld [vmem:[%s542] sm:$0x3]
    %545 = vrot.lane.b32.xlu0 %v541, 64
    %v546 = vpop.permute.xlu0 %545
    %v547 = vsel %vm35, %v546, 0
    %549 = vmatprep.subr.mxu0 0.0
    %550 = vmatpush1.msra.mxu0 0.0
    %551 = vmatprep.subr.mxu0 0.0
    %552 = vmatpush1.msra.mxu0 0.0
    %553 = vmatprep.subr.mxu0 0.0
    %554 = vmatpush1.msra.mxu0 0.0
    %555 = vmatprep.subr.mxu0 0.0
    %556 = vmatpush1.msra.mxu0 0.0
    %557 = vmatprep.subr.mxu0 0.0
    %558 = vmatpush1.msra.mxu0 0.0
    %559 = vmatprep.subr.mxu0 0.0
    %560 = vmatpush1.msra.mxu0 0.0
    %561 = vmatprep.subr.mxu0 0.0
    %562 = vmatpush1.msra.mxu0 0.0
    %563 = vmatprep.subr.mxu0 0.0
    %564 = vmatpush1.msra.mxu0 0.0
    %565 = vmatprep.subr.mxu0 0.0
    %566 = vmatpush1.msra.mxu0 0.0
    %567 = vmatprep.subr.mxu0 0.0
    %568 = vmatpush1.msra.mxu0 0.0
    %569 = vmatprep.subr.mxu0 0.0
    %570 = vmatpush1.msra.mxu0 0.0
    %571 = vmatprep.subr.mxu0 0.0
    %572 = vmatpush1.msra.mxu0 0.0
    %573 = vmatprep.subr.mxu0 0.0
    %574 = vmatpush1.msra.mxu0 %v33
    %575 = vmatprep.subr.mxu0 0.0
    %576 = vmatpush1.msra.mxu0 %v32
    %577 = vmatprep.subr.mxu0 0.0
    %578 = vmatpush1.msra.mxu0 %v31
    %579 = vmatprep.subr.mxu0 0.0
    %580 = vmatpush1.msra.mxu0 %v30
    %581 = vmatprep.subr.mxu0 0.0
    %582 = vmatpush2.msra.mxu0 0.0
    %583 = vmatprep.subr.mxu0 0.0
    %584 = vmatpush2.msra.mxu0 0.0
    %585 = vmatprep.subr.mxu0 0.0
    %586 = vmatpush2.msra.mxu0 0.0
    %587 = vmatprep.subr.mxu0 0.0
    %588 = vmatpush2.msra.mxu0 0.0
    %589 = vmatprep.subr.mxu0 0.0
    %590 = vmatpush2.msra.mxu0 0.0
    %591 = vmatprep.subr.mxu0 0.0
    %592 = vmatpush2.msra.mxu0 0.0
    %593 = vmatprep.subr.mxu0 0.0
    %594 = vmatpush2.msra.mxu0 0.0
    %595 = vmatprep.subr.mxu0 0.0
    %596 = vmatpush2.msra.mxu0 0.0
    %597 = vmatprep.subr.mxu0 0.0
    %598 = vmatpush2.msra.mxu0 0.0
    %599 = vmatprep.subr.mxu0 0.0
    %600 = vmatpush2.msra.mxu0 0.0
    %601 = vmatprep.subr.mxu0 0.0
    %602 = vmatpush2.msra.mxu0 0.0
    %603 = vmatprep.subr.mxu0 0.0
    %604 = vmatpush2.msra.mxu0 0.0
    %605 = vmatprep.subr.mxu0 0.0
    %606 = vmatpush2.msra.mxu0 0.0
    %607 = vmatprep.subr.mxu0 0.0
    %608 = vmatpush2.msra.mxu0 0.0
    %609 = vmatprep.subr.mxu0 0.0
    %610 = vmatpush2.msra.mxu0 0.0
    %611 = vmatprep.subr.mxu0 0.0
    %612 = vmatpush2.msra.mxu0 0.0
    %613 = vmatprep.mubr.f32.mxu0 0.0
    %614 = vmatmul.mubr.f32.gmra.mxu0 %v547
    %v615 = vpop.f32.mrf.mxu0
    %v616 = vadd.f32 0.0, %v615
    %v617 = vpop.f32.mrf.mxu0
    %618 = vdwg.mxu0
    %v619 = vadd.f32 %v543, %v616
    %v620 = vxor.u32 %v619, 2147483648
    %v621 = vmul.f32 %v620, 1.442695
    %v622 = vpow.pop %v621
    %v623 = vadd.f32 %v622, 1.0
    %v624 = vrcp.pop %v623
    %v625 = vmul.f32 1.0, %v624
    %v626 = vtanh.pop %v619
    %v627 = vmul.f32 %v625, %v535
    %629 = vrot.lane.b32.xlu0 %v626, 32
    %v630 = vpop.permute.xlu0 %629
    %v632 = vmul.f32 %v625, %v630
    %634 = vrot.lane.b32.xlu0 %v632, 32
    %v635 = vpop.permute.xlu0 %634
    %v637 = vadd.f32 %v627, %v635
    %v638 = vtanh.pop %v637
    %640 = vrot.lane.b32.xlu0 %v638, 32
    %v641 = vpop.permute.xlu0 %640
    %v643 = vmul.f32 %v625, %v641
    %s644 = scalar_lea.vmem %s0, 12
    %v645 = vld [vmem:[%s644] sm:$0x3]
    %647 = vrot.lane.b32.xlu0 %v643, 64
    %v648 = vpop.permute.xlu0 %647
    %v649 = vsel %vm35, %v648, 0
    %651 = vmatprep.subr.mxu0 0.0
    %652 = vmatpush1.msra.mxu0 0.0
    %653 = vmatprep.subr.mxu0 0.0
    %654 = vmatpush1.msra.mxu0 0.0
    %655 = vmatprep.subr.mxu0 0.0
    %656 = vmatpush1.msra.mxu0 0.0
    %657 = vmatprep.subr.mxu0 0.0
    %658 = vmatpush1.msra.mxu0 0.0
    %659 = vmatprep.subr.mxu0 0.0
    %660 = vmatpush1.msra.mxu0 0.0
    %661 = vmatprep.subr.mxu0 0.0
    %662 = vmatpush1.msra.mxu0 0.0
    %663 = vmatprep.subr.mxu0 0.0
    %664 = vmatpush1.msra.mxu0 0.0
    %665 = vmatprep.subr.mxu0 0.0
    %666 = vmatpush1.msra.mxu0 0.0
    %667 = vmatprep.subr.mxu0 0.0
    %668 = vmatpush1.msra.mxu0 0.0
    %669 = vmatprep.subr.mxu0 0.0
    %670 = vmatpush1.msra.mxu0 0.0
    %671 = vmatprep.subr.mxu0 0.0
    %672 = vmatpush1.msra.mxu0 0.0
    %673 = vmatprep.subr.mxu0 0.0
    %674 = vmatpush1.msra.mxu0 0.0
    %675 = vmatprep.subr.mxu0 0.0
    %676 = vmatpush1.msra.mxu0 %v33
    %677 = vmatprep.subr.mxu0 0.0
    %678 = vmatpush1.msra.mxu0 %v32
    %679 = vmatprep.subr.mxu0 0.0
    %680 = vmatpush1.msra.mxu0 %v31
    %681 = vmatprep.subr.mxu0 0.0
    %682 = vmatpush1.msra.mxu0 %v30
    %683 = vmatprep.subr.mxu0 0.0
    %684 = vmatpush2.msra.mxu0 0.0
    %685 = vmatprep.subr.mxu0 0.0
    %686 = vmatpush2.msra.mxu0 0.0
    %687 = vmatprep.subr.mxu0 0.0
    %688 = vmatpush2.msra.mxu0 0.0
    %689 = vmatprep.subr.mxu0 0.0
    %690 = vmatpush2.msra.mxu0 0.0
    %691 = vmatprep.subr.mxu0 0.0
    %692 = vmatpush2.msra.mxu0 0.0
    %693 = vmatprep.subr.mxu0 0.0
    %694 = vmatpush2.msra.mxu0 0.0
    %695 = vmatprep.subr.mxu0 0.0
    %696 = vmatpush2.msra.mxu0 0.0
    %697 = vmatprep.subr.mxu0 0.0
    %698 = vmatpush2.msra.mxu0 0.0
    %699 = vmatprep.subr.mxu0 0.0
    %700 = vmatpush2.msra.mxu0 0.0
    %701 = vmatprep.subr.mxu0 0.0
    %702 = vmatpush2.msra.mxu0 0.0
    %703 = vmatprep.subr.mxu0 0.0
    %704 = vmatpush2.msra.mxu0 0.0
    %705 = vmatprep.subr.mxu0 0.0
    %706 = vmatpush2.msra.mxu0 0.0
    %707 = vmatprep.subr.mxu0 0.0
    %708 = vmatpush2.msra.mxu0 0.0
    %709 = vmatprep.subr.mxu0 0.0
    %710 = vmatpush2.msra.mxu0 0.0
    %711 = vmatprep.subr.mxu0 0.0
    %712 = vmatpush2.msra.mxu0 0.0
    %713 = vmatprep.subr.mxu0 0.0
    %714 = vmatpush2.msra.mxu0 0.0
    %715 = vmatprep.mubr.f32.mxu0 0.0
    %716 = vmatmul.mubr.f32.gmra.mxu0 %v649
    %v717 = vpop.f32.mrf.mxu0
    %v718 = vadd.f32 0.0, %v717
    %v719 = vpop.f32.mrf.mxu0
    %720 = vdwg.mxu0
    %v721 = vadd.f32 %v645, %v718
    %v722 = vxor.u32 %v721, 2147483648
    %v723 = vmul.f32 %v722, 1.442695
    %v724 = vpow.pop %v723
    %v725 = vadd.f32 %v724, 1.0
    %v726 = vrcp.pop %v725
    %v727 = vmul.f32 1.0, %v726
    %v728 = vtanh.pop %v721
    %v729 = vmul.f32 %v727, %v637
    %731 = vrot.lane.b32.xlu0 %v728, 32
    %v732 = vpop.permute.xlu0 %731
    %v734 = vmul.f32 %v727, %v732
    %736 = vrot.lane.b32.xlu0 %v734, 32
    %v737 = vpop.permute.xlu0 %736
    %v739 = vadd.f32 %v729, %v737
    %v740 = vtanh.pop %v739
    %742 = vrot.lane.b32.xlu0 %v740, 32
    %v743 = vpop.permute.xlu0 %742
    %v745 = vmul.f32 %v727, %v743
    %s746 = scalar_lea.vmem %s0, 14
    %v747 = vld [vmem:[%s746] sm:$0x3]
    %749 = vrot.lane.b32.xlu0 %v745, 64
    %v750 = vpop.permute.xlu0 %749
    %v751 = vsel %vm35, %v750, 0
    %753 = vmatprep.subr.mxu0 0.0
    %754 = vmatpush1.msra.mxu0 0.0
    %755 = vmatprep.subr.mxu0 0.0
    %756 = vmatpush1.msra.mxu0 0.0
    %757 = vmatprep.subr.mxu0 0.0
    %758 = vmatpush1.msra.mxu0 0.0
    %759 = vmatprep.subr.mxu0 0.0
    %760 = vmatpush1.msra.mxu0 0.0
    %761 = vmatprep.subr.mxu0 0.0
    %762 = vmatpush1.msra.mxu0 0.0
    %763 = vmatprep.subr.mxu0 0.0
    %764 = vmatpush1.msra.mxu0 0.0
    %765 = vmatprep.subr.mxu0 0.0
    %766 = vmatpush1.msra.mxu0 0.0
    %767 = vmatprep.subr.mxu0 0.0
    %768 = vmatpush1.msra.mxu0 0.0
    %769 = vmatprep.subr.mxu0 0.0
    %770 = vmatpush1.msra.mxu0 0.0
    %771 = vmatprep.subr.mxu0 0.0
    %772 = vmatpush1.msra.mxu0 0.0
    %773 = vmatprep.subr.mxu0 0.0
    %774 = vmatpush1.msra.mxu0 0.0
    %775 = vmatprep.subr.mxu0 0.0
    %776 = vmatpush1.msra.mxu0 0.0
    %777 = vmatprep.subr.mxu0 0.0
    %778 = vmatpush1.msra.mxu0 %v33
    %779 = vmatprep.subr.mxu0 0.0
    %780 = vmatpush1.msra.mxu0 %v32
    %781 = vmatprep.subr.mxu0 0.0
    %782 = vmatpush1.msra.mxu0 %v31
    %783 = vmatprep.subr.mxu0 0.0
    %784 = vmatpush1.msra.mxu0 %v30
    %785 = vmatprep.subr.mxu0 0.0
    %786 = vmatpush2.msra.mxu0 0.0
    %787 = vmatprep.subr.mxu0 0.0
    %788 = vmatpush2.msra.mxu0 0.0
    %789 = vmatprep.subr.mxu0 0.0
    %790 = vmatpush2.msra.mxu0 0.0
    %791 = vmatprep.subr.mxu0 0.0
    %792 = vmatpush2.msra.mxu0 0.0
    %793 = vmatprep.subr.mxu0 0.0
    %794 = vmatpush2.msra.mxu0 0.0
    %795 = vmatprep.subr.mxu0 0.0
    %796 = vmatpush2.msra.mxu0 0.0
    %797 = vmatprep.subr.mxu0 0.0
    %798 = vmatpush2.msra.mxu0 0.0
    %799 = vmatprep.subr.mxu0 0.0
    %800 = vmatpush2.msra.mxu0 0.0
    %801 = vmatprep.subr.mxu0 0.0
    %802 = vmatpush2.msra.mxu0 0.0
    %803 = vmatprep.subr.mxu0 0.0
    %804 = vmatpush2.msra.mxu0 0.0
    %805 = vmatprep.subr.mxu0 0.0
    %806 = vmatpush2.msra.mxu0 0.0
    %807 = vmatprep.subr.mxu0 0.0
    %808 = vmatpush2.msra.mxu0 0.0
    %809 = vmatprep.subr.mxu0 0.0
    %810 = vmatpush2.msra.mxu0 0.0
    %811 = vmatprep.subr.mxu0 0.0
    %812 = vmatpush2.msra.mxu0 0.0
    %813 = vmatprep.subr.mxu0 0.0
    %814 = vmatpush2.msra.mxu0 0.0
    %815 = vmatprep.subr.mxu0 0.0
    %816 = vmatpush2.msra.mxu0 0.0
    %817 = vmatprep.mubr.f32.mxu0 0.0
    %818 = vmatmul.mubr.f32.gmra.mxu0 %v751
    %v819 = vpop.f32.mrf.mxu0
    %v820 = vadd.f32 0.0, %v819
    %v821 = vpop.f32.mrf.mxu0
    %822 = vdwg.mxu0
    %v823 = vadd.f32 %v747, %v820
    %v824 = vxor.u32 %v823, 2147483648
    %v825 = vmul.f32 %v824, 1.442695
    %v826 = vpow.pop %v825
    %v827 = vadd.f32 %v826, 1.0
    %v828 = vrcp.pop %v827
    %v829 = vmul.f32 1.0, %v828
    %v830 = vtanh.pop %v823
    %v831 = vmul.f32 %v829, %v739
    %833 = vrot.lane.b32.xlu0 %v830, 32
    %v834 = vpop.permute.xlu0 %833
    %v836 = vmul.f32 %v829, %v834
    %838 = vrot.lane.b32.xlu0 %v836, 32
    %v839 = vpop.permute.xlu0 %838
    %v841 = vadd.f32 %v831, %v839
    %v842 = vtanh.pop %v841
    %844 = vrot.lane.b32.xlu0 %v842, 32
    %v845 = vpop.permute.xlu0 %844
    %v847 = vmul.f32 %v829, %v845
    %v848 = vld [vmem:[%s1] sm:$0x3]
    %v849 = vld [vmem:[%s3] sm:$0xf]
    %v850 = vld [vmem:[%s4] sm:$0x1]
    %v852 = vlaneseq
    %v853 = vshrl.u32 %v852, 7
    %v854 = vsub.s32 0, %v853
    %v855 = vrot.slane %v850, %v854
    %vm857 = vcmask 31744
    %v859 = vsel %vm857, %v848, 0
    %vm861 = vcmask 1043456
    %v863 = vsel %vm861, %v849, 0
    %865 = vmatprep.subr.mxu0 0.0
    %866 = vmatpush1.msra.mxu0 0.0
    %867 = vmatprep.subr.mxu0 0.0
    %868 = vmatpush1.msra.mxu0 0.0
    %869 = vmatprep.subr.mxu0 0.0
    %870 = vmatpush1.msra.mxu0 0.0
    %871 = vmatprep.subr.mxu0 0.0
    %872 = vmatpush1.msra.mxu0 0.0
    %873 = vmatprep.subr.mxu0 0.0
    %874 = vmatpush1.msra.mxu0 0.0
    %875 = vmatprep.subr.mxu0 0.0
    %876 = vmatpush1.msra.mxu0 0.0
    %877 = vmatprep.subr.mxu0 0.0
    %878 = vmatpush1.msra.mxu0 0.0
    %879 = vmatprep.subr.mxu0 0.0
    %880 = vmatpush1.msra.mxu0 0.0
    %881 = vmatprep.subr.mxu0 0.0
    %882 = vmatpush1.msra.mxu0 0.0
    %883 = vmatprep.subr.mxu0 0.0
    %884 = vmatpush1.msra.mxu0 0.0
    %885 = vmatprep.subr.mxu0 0.0
    %886 = vmatpush1.msra.mxu0 0.0
    %887 = vmatprep.subr.mxu0 0.0
    %888 = vmatpush1.msra.mxu0 0.0
    %889 = vmatprep.subr.mxu0 0.0
    %890 = vmatpush1.msra.mxu0 0.0
    %891 = vmatprep.subr.mxu0 0.0
    %892 = vmatpush1.msra.mxu0 0.0
    %893 = vmatprep.subr.mxu0 0.0
    %894 = vmatpush1.msra.mxu0 0.0
    %895 = vmatprep.subr.mxu0 0.0
    %896 = vmatpush1.msra.mxu0 %v863
    %897 = vmatprep.subr.mxu0 0.0
    %898 = vmatpush2.msra.mxu0 0.0
    %899 = vmatprep.subr.mxu0 0.0
    %900 = vmatpush2.msra.mxu0 0.0
    %901 = vmatprep.subr.mxu0 0.0
    %902 = vmatpush2.msra.mxu0 0.0
    %903 = vmatprep.subr.mxu0 0.0
    %904 = vmatpush2.msra.mxu0 0.0
    %905 = vmatprep.subr.mxu0 0.0
    %906 = vmatpush2.msra.mxu0 0.0
    %907 = vmatprep.subr.mxu0 0.0
    %908 = vmatpush2.msra.mxu0 0.0
    %909 = vmatprep.subr.mxu0 0.0
    %910 = vmatpush2.msra.mxu0 0.0
    %911 = vmatprep.subr.mxu0 0.0
    %912 = vmatpush2.msra.mxu0 0.0
    %913 = vmatprep.subr.mxu0 0.0
    %914 = vmatpush2.msra.mxu0 0.0
    %915 = vmatprep.subr.mxu0 0.0
    %916 = vmatpush2.msra.mxu0 0.0
    %917 = vmatprep.subr.mxu0 0.0
    %918 = vmatpush2.msra.mxu0 0.0
    %919 = vmatprep.subr.mxu0 0.0
    %920 = vmatpush2.msra.mxu0 0.0
    %921 = vmatprep.subr.mxu0 0.0
    %922 = vmatpush2.msra.mxu0 0.0
    %923 = vmatprep.subr.mxu0 0.0
    %924 = vmatpush2.msra.mxu0 0.0
    %925 = vmatprep.subr.mxu0 0.0
    %926 = vmatpush2.msra.mxu0 0.0
    %927 = vmatprep.subr.mxu0 0.0
    %928 = vmatpush2.msra.mxu0 0.0
    %929 = vmatprep.mubr.f32.mxu0 0.0
    %930 = vmatmul.mubr.f32.gmra.mxu0 %v859
    %v931 = vpop.f32.mrf.mxu0
    %v932 = vadd.f32 %v855, %v931
    %v933 = vpop.f32.mrf.mxu0
    %934 = vdwg.mxu0
    %v935 = vmax.f32 %v932, 0.0
    %v936 = vld [vmem:[%s5] sm:$0xff]
    %v937 = vld [vmem:[%s5 + $0x8] sm:$0xff]
    %v938 = vld [vmem:[%s5 + $0x10] sm:$0xff]
    %v939 = vld [vmem:[%s5 + $0x18] sm:$0xff]
    %v940 = vld [vmem:[%s6] sm:$0xff]
    %v941 = vld [vmem:[%s6 + $0x8] sm:$0xff]
    %v942 = vld [vmem:[%s6 + $0x10] sm:$0xff]
    %v943 = vld [vmem:[%s6 + $0x18] sm:$0xff]
    %v945 = vsel %vm35, %v935, 0
    %947 = vmatprep.subr.mxu0 0.0
    %948 = vmatpush1.msra.mxu0 0.0
    %949 = vmatprep.subr.mxu0 0.0
    %950 = vmatpush1.msra.mxu0 0.0
    %951 = vmatprep.subr.mxu0 0.0
    %952 = vmatpush1.msra.mxu0 0.0
    %953 = vmatprep.subr.mxu0 0.0
    %954 = vmatpush1.msra.mxu0 0.0
    %955 = vmatprep.subr.mxu0 0.0
    %956 = vmatpush1.msra.mxu0 0.0
    %957 = vmatprep.subr.mxu0 0.0
    %958 = vmatpush1.msra.mxu0 0.0
    %959 = vmatprep.subr.mxu0 0.0
    %960 = vmatpush1.msra.mxu0 0.0
    %961 = vmatprep.subr.mxu0 0.0
    %962 = vmatpush1.msra.mxu0 0.0
    %963 = vmatprep.subr.mxu0 0.0
    %964 = vmatpush1.msra.mxu0 0.0
    %965 = vmatprep.subr.mxu0 0.0
    %966 = vmatpush1.msra.mxu0 0.0
    %967 = vmatprep.subr.mxu0 0.0
    %968 = vmatpush1.msra.mxu0 0.0
    %969 = vmatprep.subr.mxu0 0.0
    %970 = vmatpush1.msra.mxu0 0.0
    %971 = vmatprep.subr.mxu0 0.0
    %972 = vmatpush1.msra.mxu0 %v943
    %973 = vmatprep.subr.mxu0 0.0
    %974 = vmatpush1.msra.mxu0 %v942
    %975 = vmatprep.subr.mxu0 0.0
    %976 = vmatpush1.msra.mxu0 %v941
    %977 = vmatprep.subr.mxu0 0.0
    %978 = vmatpush1.msra.mxu0 %v940
    %979 = vmatprep.subr.mxu0 0.0
    %980 = vmatpush2.msra.mxu0 0.0
    %981 = vmatprep.subr.mxu0 0.0
    %982 = vmatpush2.msra.mxu0 0.0
    %983 = vmatprep.subr.mxu0 0.0
    %984 = vmatpush2.msra.mxu0 0.0
    %985 = vmatprep.subr.mxu0 0.0
    %986 = vmatpush2.msra.mxu0 0.0
    %987 = vmatprep.subr.mxu0 0.0
    %988 = vmatpush2.msra.mxu0 0.0
    %989 = vmatprep.subr.mxu0 0.0
    %990 = vmatpush2.msra.mxu0 0.0
    %991 = vmatprep.subr.mxu0 0.0
    %992 = vmatpush2.msra.mxu0 0.0
    %993 = vmatprep.subr.mxu0 0.0
    %994 = vmatpush2.msra.mxu0 0.0
    %995 = vmatprep.subr.mxu0 0.0
    %996 = vmatpush2.msra.mxu0 0.0
    %997 = vmatprep.subr.mxu0 0.0
    %998 = vmatpush2.msra.mxu0 0.0
    %999 = vmatprep.subr.mxu0 0.0
    %1000 = vmatpush2.msra.mxu0 0.0
    %1001 = vmatprep.subr.mxu0 0.0
    %1002 = vmatpush2.msra.mxu0 0.0
    %1003 = vmatprep.subr.mxu0 0.0
    %1004 = vmatpush2.msra.mxu0 0.0
    %1005 = vmatprep.subr.mxu0 0.0
    %1006 = vmatpush2.msra.mxu0 0.0
    %1007 = vmatprep.subr.mxu0 0.0
    %1008 = vmatpush2.msra.mxu0 0.0
    %1009 = vmatprep.subr.mxu0 0.0
    %1010 = vmatpush2.msra.mxu0 0.0
    %1011 = vmatprep.mubr.f32.mxu0 0.0
    %1012 = vmatmul.mubr.f32.gmra.mxu0 %v945
    %v1013 = vpop.f32.mrf.mxu0
    %v1014 = vadd.f32 0.0, %v1013
    %v1015 = vpop.f32.mrf.mxu0
    %1016 = vdwg.mxu0
    %1018 = vrot.lane.b32.xlu0 %v847, 64
    %v1019 = vpop.permute.xlu0 %1018
    %v1020 = vsel %vm35, %v1019, 0
    %1022 = vmatprep.subr.mxu0 0.0
    %1023 = vmatpush1.msra.mxu0 0.0
    %1024 = vmatprep.subr.mxu0 0.0
    %1025 = vmatpush1.msra.mxu0 0.0
    %1026 = vmatprep.subr.mxu0 0.0
    %1027 = vmatpush1.msra.mxu0 0.0
    %1028 = vmatprep.subr.mxu0 0.0
    %1029 = vmatpush1.msra.mxu0 0.0
    %1030 = vmatprep.subr.mxu0 0.0
    %1031 = vmatpush1.msra.mxu0 0.0
    %1032 = vmatprep.subr.mxu0 0.0
    %1033 = vmatpush1.msra.mxu0 0.0
    %1034 = vmatprep.subr.mxu0 0.0
    %1035 = vmatpush1.msra.mxu0 0.0
    %1036 = vmatprep.subr.mxu0 0.0
    %1037 = vmatpush1.msra.mxu0 0.0
    %1038 = vmatprep.subr.mxu0 0.0
    %1039 = vmatpush1.msra.mxu0 0.0
    %1040 = vmatprep.subr.mxu0 0.0
    %1041 = vmatpush1.msra.mxu0 0.0
    %1042 = vmatprep.subr.mxu0 0.0
    %1043 = vmatpush1.msra.mxu0 0.0
    %1044 = vmatprep.subr.mxu0 0.0
    %1045 = vmatpush1.msra.mxu0 0.0
    %1046 = vmatprep.subr.mxu0 0.0
    %1047 = vmatpush1.msra.mxu0 %v939
    %1048 = vmatprep.subr.mxu0 0.0
    %1049 = vmatpush1.msra.mxu0 %v938
    %1050 = vmatprep.subr.mxu0 0.0
    %1051 = vmatpush1.msra.mxu0 %v937
    %1052 = vmatprep.subr.mxu0 0.0
    %1053 = vmatpush1.msra.mxu0 %v936
    %1054 = vmatprep.subr.mxu0 0.0
    %1055 = vmatpush2.msra.mxu0 0.0
    %1056 = vmatprep.subr.mxu0 0.0
    %1057 = vmatpush2.msra.mxu0 0.0
    %1058 = vmatprep.subr.mxu0 0.0
    %1059 = vmatpush2.msra.mxu0 0.0
    %1060 = vmatprep.subr.mxu0 0.0
    %1061 = vmatpush2.msra.mxu0 0.0
    %1062 = vmatprep.subr.mxu0 0.0
    %1063 = vmatpush2.msra.mxu0 0.0
    %1064 = vmatprep.subr.mxu0 0.0
    %1065 = vmatpush2.msra.mxu0 0.0
    %1066 = vmatprep.subr.mxu0 0.0
    %1067 = vmatpush2.msra.mxu0 0.0
    %1068 = vmatprep.subr.mxu0 0.0
    %1069 = vmatpush2.msra.mxu0 0.0
    %1070 = vmatprep.subr.mxu0 0.0
    %1071 = vmatpush2.msra.mxu0 0.0
    %1072 = vmatprep.subr.mxu0 0.0
    %1073 = vmatpush2.msra.mxu0 0.0
    %1074 = vmatprep.subr.mxu0 0.0
    %1075 = vmatpush2.msra.mxu0 0.0
    %1076 = vmatprep.subr.mxu0 0.0
    %1077 = vmatpush2.msra.mxu0 0.0
    %1078 = vmatprep.subr.mxu0 0.0
    %1079 = vmatpush2.msra.mxu0 0.0
    %1080 = vmatprep.subr.mxu0 0.0
    %1081 = vmatpush2.msra.mxu0 0.0
    %1082 = vmatprep.subr.mxu0 0.0
    %1083 = vmatpush2.msra.mxu0 0.0
    %1084 = vmatprep.subr.mxu0 0.0
    %1085 = vmatpush2.msra.mxu0 0.0
    %1086 = vmatprep.mubr.f32.mxu0 0.0
    %1087 = vmatmul.mubr.f32.gmra.mxu0 %v1020
    %v1088 = vpop.f32.mrf.mxu0
    %v1089 = vadd.f32 %v1014, %v1088
    %v1090 = vpop.f32.mrf.mxu0
    %1091 = vdwg.mxu0
    %v1092 = vld [vmem:[%s7] sm:$0x1]
    %v1094 = vlaneseq
    %v1095 = vshrl.u32 %v1094, 7
    %v1096 = vsub.s32 0, %v1095
    %v1097 = vrot.slane %v1092, %v1096
    %v1099 = vadd.f32 %v1089, %v1097
    %vm1100 = vcmask 9216
    %1101 = vst.msk [vmem:[#allocation2] sm:$0x3] %vm1100, %v1099
    // Predicated region
    $region34: #{sequence_nn_forward.1} parent=1 // pred_check
      _
    $region35: #{sequence_nn_forward.1} parent=1 // pred_check_branch
      %1103 = sbr.rel (0) target = $region37
    $region36: #{sequence_nn_forward.1} parent=1 // pred_region
      %s1105 = ssub.s32 32, 32
      %1106 = vsyncadd [#allocation3], %s1105
      %s1108 = sshll.u32 [#allocation2], 4
      %s1109 = int_to_ptr.vmem [resolvable:$true] %s1108
      %1111 = dma.vmem_to_hbm [thread:$0]  %s1109, 32, %s8, [#allocation3]
    $region37: #{sequence_nn_forward.1} parent=1 // pred_fallthru
      _
    // Predicated region
    $region38: #{sequence_nn_forward.1} parent=1 // pred_check
      _
    $region39: #{sequence_nn_forward.1} parent=1 // pred_check_branch
      %1113 = sbr.rel (0) target = $region41
    $region40: #{sequence_nn_forward.1} parent=1 // pred_region
      %1114 = dma.done [#allocation3], 32
    $region41: #{sequence_nn_forward.1} parent=1 // pred_fallthru
      _
    %1115 = vsyncpa [#allocation3], 1

</llo_original>
